<compile_context>
chip_gen: v7x
topology: tpu7x:2x2x1
jax: 0.10.0
libtpu: 0.0.40
codegen_flags: <defaults>
</compile_context>

<pallas_src>
import jax
import jax.numpy as jnp
from jax.experimental import pallas as pl
from jax.experimental.pallas import tpu as pltpu

# Problem sizes (consistent with the module; batch sized to exercise the grid)
B = 256   # batch
D = 16    # feature dim (shapeList = [D])
H = 32    # hidden width of each s/t MLP
L = 4     # NumLayers

MATMUL_DTYPE = jnp.bfloat16   # MXU input dtype (accumulation stays f32)


# ------------------------------- Pallas kernel --------------------------------
def realnvp_logprob_kernel(x_ref, w1_ref, b1_ref, w2_ref, b2_ref, out_ref):
    """x_ref: (b_tile, D) tile straight from HBM (no wrapper transpose/pad).
    Weights are mask-folded, s/t fused, bf16, stacked in _inference (reversed) order."""
    # one in-kernel transpose to the batch-on-lanes compute layout (XLU, cheap)
    y = x_ref[...].T                                  # (D, Bt) f32
    s_acc = jnp.zeros_like(y)                         # running sum of s (masked lanes 0)

    for l in range(L):                                # fully unrolled, layers pre-reversed
        # fused first layer: (2H, D) @ (D, Bt) -> (2H, Bt)   [input mask folded into w1]
        h = jnp.dot(w1_ref[l], y.astype(MATMUL_DTYPE),
                    preferred_element_type=jnp.float32) + b1_ref[l]
        h = jnp.maximum(h, 0.0)
        # fused block-diagonal second layer: (2D, 2H) @ (2H, Bt) -> (2D, Bt)
        # [output mask folded into w2/b2 -> s,t are exactly 0 on pass-through lanes]
        st = jnp.dot(w2_ref[l], h.astype(MATMUL_DTYPE),
                     preferred_element_type=jnp.float32) + b2_ref[l]
        s = st[:D, :]                                 # (D, Bt)  sublane slice (8-aligned)
        t = st[D:, :]                                 # (D, Bt)
        # coupling update: on masked lanes s = t = 0 so (y - t)*exp(-s) == y,
        # which is exactly mask_*(y - t)*exp(-s) + mask*y -> no select needed.
        y = (y - t) * jnp.exp(-s)
        s_acc = s_acc + s

    # prior logP + inference logjac: one fused reduction over the feature sublanes,
    # lane-dense (1, Bt) store.
    out_ref[...] = -jnp.sum(0.5 * y * y + s_acc, axis=0, keepdims=True)


# ------------------------- parameter preparation (init) ------------------------
def prepare_params(mask, mask_, s_params, t_params):
    """Fold the coupling masks into the MLP weights and fuse the s/t nets.
    Done ONCE at init time.  Returns stacked (over layers, in the reversed order that
    _inference traverses) fused weights:
      W1: (L, 2H, D) bf16, B1: (L, 2H, 1) f32, W2: (L, 2D, 2H) bf16, B2: (L, 2D, 1) f32."""
    sw1, sb1, sw2, sb2 = s_params
    tw1, tb1, tw2, tb2 = t_params
    W1, B1, W2, B2 = [], [], [], []
    for i in reversed(range(L)):
        ma = mask[i] if i % 2 == 0 else mask_[i]      # input mask  (y_ = ma * y)
        mb = mask_[i] if i % 2 == 0 else mask[i]      # output mask (s,t *= mb)

        # first layer: h = (ma*y) @ w1 + b1  ==  (w1.T * ma) @ y_col + b1
        w1s = (sw1[i] * ma[:, None]).T                # (H, D)
        w1t = (tw1[i] * ma[:, None]).T                # (H, D)
        W1.append(jnp.concatenate([w1s, w1t], axis=0))                        # (2H, D)
        B1.append(jnp.concatenate([sb1[i], tb1[i]])[:, None])                 # (2H, 1)

        # second layer with output mask folded:  s = h_s @ (w2*mb) + b2*mb
        w2s = (sw2[i] * mb[None, :]).T                # (D, H)
        w2t = (tw2[i] * mb[None, :]).T                # (D, H)
        zero = jnp.zeros_like(w2s)
        top = jnp.concatenate([w2s, zero], axis=1)    # (D, 2H)  -> s rows
        bot = jnp.concatenate([zero, w2t], axis=1)    # (D, 2H)  -> t rows
        W2.append(jnp.concatenate([top, bot], axis=0))                        # (2D, 2H)
        B2.append(jnp.concatenate([sb2[i] * mb, tb2[i] * mb])[:, None])       # (2D, 1)

    # MXU inputs in bf16 (0/1 masks stay exact zeros, so the no-select property holds);
    # biases stay f32 (added to the f32 accumulator).
    return (jnp.stack(W1).astype(MATMUL_DTYPE), jnp.stack(B1),
            jnp.stack(W2).astype(MATMUL_DTYPE), jnp.stack(B2))


# ------------------------------ tile-size policy -------------------------------
def choose_b_tile(batch):
    """Per-generation lane-tile choice (perf review):
      v6e: 256 lanes to match the 256-wide MXU; single TC, so a short grid is fine.
      v5e: 256 lanes (fewer grid steps; MXU is 128-wide so no per-push width win).
      v7x: prefer 256 but keep >=2 'parallel' grid steps so both TensorCores get work.
    Capped at 256 so the unrolled layer loop never spills vregs."""
    try:
        kind = jax.devices()[0].device_kind.lower()
    except Exception:
        kind = ""
    b_tile = 256
    if "v7" in kind and batch < 2 * 256:
        b_tile = 128            # 2-TC chip: keep grid length >= 2 for small batches
    if batch <= 128:
        b_tile = 128
    return b_tile


# ---------------------------------- wrapper ------------------------------------
def realnvp_log_probability(x, fused_params, *, b_tile=None):
    """x: (B, D) float32 (module layout).  Returns (B,) log-probabilities."""
    W1, B1_, W2, B2_ = fused_params
    Bn, Dn = x.shape
    if b_tile is None:
        b_tile = choose_b_tile(Bn)

    n_tiles = pl.cdiv(Bn, b_tile)
    n_pad = n_tiles * b_tile
    # No transpose and (in the common divisible case) no copy: x goes to the kernel
    # untouched; the tiny tile transpose happens in-kernel on the XLU.
    x_in = x if n_pad == Bn else jnp.pad(x, ((0, n_pad - Bn), (0, 0)))

    flops = 2 * n_pad * L * (Dn * 2 * H + 2 * H * 2 * Dn)
    bytes_accessed = 4 * (Dn * n_pad + n_pad) + 2 * (W1.size + W2.size) \
        + 4 * (B1_.size + B2_.size)
    cost = pl.CostEstimate(flops=flops,
                           transcendentals=n_pad * L * Dn,
                           bytes_accessed=bytes_accessed)

    def const_spec(arr):
        nd = arr.ndim
        return pl.BlockSpec(arr.shape, lambda i, _nd=nd: (0,) * _nd)

    out = pl.pallas_call(
        realnvp_logprob_kernel,
        out_shape=jax.ShapeDtypeStruct((1, n_pad), jnp.float32),
        grid_spec=pltpu.PrefetchScalarGridSpec(
            num_scalar_prefetch=0,
            grid=(n_tiles,),
            in_specs=[
                pl.BlockSpec((b_tile, Dn), lambda i: (i, 0)),   # x tile, untransposed
                const_spec(W1), const_spec(B1_),                # weights stay resident
                const_spec(W2), const_spec(B2_),
            ],
            out_specs=pl.BlockSpec((1, b_tile), lambda i: (0, i)),  # lane-dense output
        ),
        compiler_params=pltpu.CompilerParams(dimension_semantics=("parallel",)),
        cost_estimate=cost,
    )(x_in, W1, B1_, W2, B2_)
    return out[0, :Bn]                                # (B,)


# ----------------------------- pure-JAX reference -----------------------------
def reference_log_probability(x, mask, mask_, s_params, t_params):
    """Direct transcription of the PyTorch _logProbability (unfused, unfolded, f32)."""
    sw1, sb1, sw2, sb2 = s_params
    tw1, tb1, tw2, tb2 = t_params

    def mlp(v, w1, b1, w2, b2):
        h = jnp.maximum(v @ w1 + b1[None, :], 0.0)
        return h @ w2 + b2[None, :]

    y = x
    logjac = jnp.zeros((x.shape[0],), jnp.float32)
    for i in reversed(range(L)):
        if i % 2 == 0:
            y_ = mask[i][None, :] * y
            s = mlp(y_, sw1[i], sb1[i], sw2[i], sb2[i]) * mask_[i][None, :]
            t = mlp(y_, tw1[i], tb1[i], tw2[i], tb2[i]) * mask_[i][None, :]
            y = mask_[i][None, :] * (y - t) * jnp.exp(-s) + y_
        else:
            y_ = mask_[i][None, :] * y
            s = mlp(y_, sw1[i], sb1[i], sw2[i], sb2[i]) * mask[i][None, :]
            t = mlp(y_, tw1[i], tb1[i], tw2[i], tb2[i]) * mask[i][None, :]
            y = mask[i][None, :] * (y - t) * jnp.exp(-s) + y_
        logjac = logjac - jnp.sum(s, axis=-1)
    prior_lp = -0.5 * jnp.sum(y * y, axis=-1)
    return prior_lp + logjac


# ----------------------------------- main -----------------------------------
if __name__ == "__main__":
    key = jax.random.PRNGKey(0)
    keys = jax.random.split(key, 3)

    x = jax.random.normal(keys[0], (B, D), dtype=jnp.float32)

    # checkerboard masks alternating with layer index; mask_ = 1 - mask
    lane = jnp.arange(D)
    mask = jnp.stack(
        [((lane + i) % 2).astype(jnp.float32) for i in range(L)], axis=0
    )                                                 # (L, D)
    mask_ = 1.0 - mask

    def init_net(k):
        k1, k2, k3, k4 = jax.random.split(k, 4)
        w1 = 0.1 * jax.random.normal(k1, (L, D, H), dtype=jnp.float32)
        b1 = 0.1 * jax.random.normal(k2, (L, H), dtype=jnp.float32)
        w2 = 0.1 * jax.random.normal(k3, (L, H, D), dtype=jnp.float32)
        b2 = 0.1 * jax.random.normal(k4, (L, D), dtype=jnp.float32)
        return (w1, b1, w2, b2)

    s_params = init_net(keys[1])   # sList: L MLPs, stacked
    t_params = init_net(keys[2])   # tList: L MLPs, stacked

    # one-time parameter fold/fuse/cast (init-time, not per call)
    fused_params = prepare_params(mask, mask_, s_params, t_params)

    out = realnvp_log_probability(x, fused_params)
    out = jax.block_until_ready(out)

    ref = reference_log_probability(x, mask, mask_, s_params, t_params)
    assert out.shape == (B,)
    # Tolerance accounts for bf16 MXU inputs (accumulation and all elementwise math f32);
    # observed deviation is ~1e-2 rms at these sizes.
    assert jnp.allclose(out, ref, atol=5e-2, rtol=5e-3), (out, ref)

    print("KERNEL_OK")
</pallas_src>

<mosaic_0001>
module attributes {stable_mosaic.version = 11 : i64} {
  func.func @realnvp_logprob_kernel(%arg0: i32, %arg1: memref<256x16xf32, #tpu.memory_space<vmem>>, %arg2: memref<4x64x16xbf16, #tpu.memory_space<vmem>>, %arg3: memref<4x64x1xf32, #tpu.memory_space<vmem>>, %arg4: memref<4x32x64xbf16, #tpu.memory_space<vmem>>, %arg5: memref<4x32x1xf32, #tpu.memory_space<vmem>>, %arg6: memref<1x256xf32, #tpu.memory_space<vmem>>) attributes {dimension_semantics = [#tpu.dimension_semantics<parallel>], iteration_bounds = array<i64: 1>, scalar_prefetch = 0 : i64, scratch_operands = 0 : i64, tpu.core_type = #tpu.core_type<tc>, window_params = [{transform_indices = @transform_0, window_bounds = array<i64: 256, 16>}, {pipeline_mode = #tpu.pipeline_mode<synchronous>, transform_indices = @transform_1, window_bounds = array<i64: 4, 64, 16>}, {pipeline_mode = #tpu.pipeline_mode<synchronous>, transform_indices = @transform_2, window_bounds = array<i64: 4, 64, 1>}, {pipeline_mode = #tpu.pipeline_mode<synchronous>, transform_indices = @transform_3, window_bounds = array<i64: 4, 32, 64>}, {pipeline_mode = #tpu.pipeline_mode<synchronous>, transform_indices = @transform_4, window_bounds = array<i64: 4, 32, 1>}, {transform_indices = @transform_5, window_bounds = array<i64: 1, 256>}]} {
    %c0 = arith.constant 0 : index
    %c0_0 = arith.constant 0 : index
    %0 = vector.load %arg1[%c0, %c0_0] : memref<256x16xf32, #tpu.memory_space<vmem>>, vector<256x16xf32>
    %1 = tpu.transpose %0, [1, 0] : vector<256x16xf32> -> vector<16x256xf32>
    %cst = arith.constant 0.000000e+00 : f32
    %2 = vector.broadcast %cst : f32 to vector<16x256xf32>
    %c0_1 = arith.constant 0 : index
    %c0_2 = arith.constant 0 : index
    %c0_3 = arith.constant 0 : index
    %3 = vector.load %arg2[%c0_1, %c0_2, %c0_3] : memref<4x64x16xbf16, #tpu.memory_space<vmem>>, vector<1x64x16xbf16>
    %4 = vector.shape_cast %3 : vector<1x64x16xbf16> to vector<64x16xbf16>
    %5 = arith.truncf %1 : vector<16x256xf32> to vector<16x256xbf16>
    %cst_4 = arith.constant dense<0.000000e+00> : vector<64x256xf32>
    %6 = tpu.matmul %4, %5, %cst_4 {dimension_numbers = #tpu.dot_dimension_numbers<[1], [0], [0], [1], [0, 0, 1, 1], [], []>} : vector<64x16xbf16>, vector<16x256xbf16>, vector<64x256xf32> -> vector<64x256xf32>
    %c0_5 = arith.constant 0 : index
    %c0_6 = arith.constant 0 : index
    %c0_7 = arith.constant 0 : index
    %7 = vector.load %arg3[%c0_5, %c0_6, %c0_7] : memref<4x64x1xf32, #tpu.memory_space<vmem>>, vector<1x64x1xf32>
    %8 = vector.shape_cast %7 : vector<1x64x1xf32> to vector<64x1xf32>
    %9 = vector.broadcast %8 : vector<64x1xf32> to vector<64x256xf32>
    %10 = arith.addf %6, %9 : vector<64x256xf32>
    %cst_8 = arith.constant 0.000000e+00 : f32
    %11 = vector.broadcast %cst_8 : f32 to vector<64x256xf32>
    %12 = arith.maximumf %10, %11 : vector<64x256xf32>
    %c0_9 = arith.constant 0 : index
    %c0_10 = arith.constant 0 : index
    %c0_11 = arith.constant 0 : index
    %13 = vector.load %arg4[%c0_9, %c0_10, %c0_11] : memref<4x32x64xbf16, #tpu.memory_space<vmem>>, vector<1x32x64xbf16>
    %14 = vector.shape_cast %13 : vector<1x32x64xbf16> to vector<32x64xbf16>
    %15 = arith.truncf %12 : vector<64x256xf32> to vector<64x256xbf16>
    %cst_12 = arith.constant dense<0.000000e+00> : vector<32x256xf32>
    %16 = tpu.matmul %14, %15, %cst_12 {dimension_numbers = #tpu.dot_dimension_numbers<[1], [0], [0], [1], [0, 0, 1, 1], [], []>} : vector<32x64xbf16>, vector<64x256xbf16>, vector<32x256xf32> -> vector<32x256xf32>
    %c0_13 = arith.constant 0 : index
    %c0_14 = arith.constant 0 : index
    %c0_15 = arith.constant 0 : index
    %17 = vector.load %arg5[%c0_13, %c0_14, %c0_15] : memref<4x32x1xf32, #tpu.memory_space<vmem>>, vector<1x32x1xf32>
    %18 = vector.shape_cast %17 : vector<1x32x1xf32> to vector<32x1xf32>
    %19 = vector.broadcast %18 : vector<32x1xf32> to vector<32x256xf32>
    %20 = arith.addf %16, %19 : vector<32x256xf32>
    %21 = vector.extract_strided_slice %20 {offsets = [0, 0], sizes = [16, 256], strides = [1, 1]} : vector<32x256xf32> to vector<16x256xf32>
    %22 = vector.extract_strided_slice %20 {offsets = [16, 0], sizes = [16, 256], strides = [1, 1]} : vector<32x256xf32> to vector<16x256xf32>
    %23 = arith.subf %1, %22 : vector<16x256xf32>
    %cst_16 = arith.constant 0.000000e+00 : f32
    %24 = vector.broadcast %cst_16 : f32 to vector<16x256xf32>
    %25 = arith.subf %24, %21 : vector<16x256xf32>
    %26 = math.exp %25 : vector<16x256xf32>
    %27 = arith.mulf %23, %26 : vector<16x256xf32>
    %28 = arith.addf %2, %21 : vector<16x256xf32>
    %c1 = arith.constant 1 : index
    %c0_17 = arith.constant 0 : index
    %c0_18 = arith.constant 0 : index
    %29 = vector.load %arg2[%c1, %c0_17, %c0_18] : memref<4x64x16xbf16, #tpu.memory_space<vmem>>, vector<1x64x16xbf16>
    %30 = vector.shape_cast %29 : vector<1x64x16xbf16> to vector<64x16xbf16>
    %31 = arith.truncf %27 : vector<16x256xf32> to vector<16x256xbf16>
    %cst_19 = arith.constant dense<0.000000e+00> : vector<64x256xf32>
    %32 = tpu.matmul %30, %31, %cst_19 {dimension_numbers = #tpu.dot_dimension_numbers<[1], [0], [0], [1], [0, 0, 1, 1], [], []>} : vector<64x16xbf16>, vector<16x256xbf16>, vector<64x256xf32> -> vector<64x256xf32>
    %c1_20 = arith.constant 1 : index
    %c0_21 = arith.constant 0 : index
    %c0_22 = arith.constant 0 : index
    %33 = vector.load %arg3[%c1_20, %c0_21, %c0_22] : memref<4x64x1xf32, #tpu.memory_space<vmem>>, vector<1x64x1xf32>
    %34 = vector.shape_cast %33 : vector<1x64x1xf32> to vector<64x1xf32>
    %35 = vector.broadcast %34 : vector<64x1xf32> to vector<64x256xf32>
    %36 = arith.addf %32, %35 : vector<64x256xf32>
    %cst_23 = arith.constant 0.000000e+00 : f32
    %37 = vector.broadcast %cst_23 : f32 to vector<64x256xf32>
    %38 = arith.maximumf %36, %37 : vector<64x256xf32>
    %c1_24 = arith.constant 1 : index
    %c0_25 = arith.constant 0 : index
    %c0_26 = arith.constant 0 : index
    %39 = vector.load %arg4[%c1_24, %c0_25, %c0_26] : memref<4x32x64xbf16, #tpu.memory_space<vmem>>, vector<1x32x64xbf16>
    %40 = vector.shape_cast %39 : vector<1x32x64xbf16> to vector<32x64xbf16>
    %41 = arith.truncf %38 : vector<64x256xf32> to vector<64x256xbf16>
    %cst_27 = arith.constant dense<0.000000e+00> : vector<32x256xf32>
    %42 = tpu.matmul %40, %41, %cst_27 {dimension_numbers = #tpu.dot_dimension_numbers<[1], [0], [0], [1], [0, 0, 1, 1], [], []>} : vector<32x64xbf16>, vector<64x256xbf16>, vector<32x256xf32> -> vector<32x256xf32>
    %c1_28 = arith.constant 1 : index
    %c0_29 = arith.constant 0 : index
    %c0_30 = arith.constant 0 : index
    %43 = vector.load %arg5[%c1_28, %c0_29, %c0_30] : memref<4x32x1xf32, #tpu.memory_space<vmem>>, vector<1x32x1xf32>
    %44 = vector.shape_cast %43 : vector<1x32x1xf32> to vector<32x1xf32>
    %45 = vector.broadcast %44 : vector<32x1xf32> to vector<32x256xf32>
    %46 = arith.addf %42, %45 : vector<32x256xf32>
    %47 = vector.extract_strided_slice %46 {offsets = [0, 0], sizes = [16, 256], strides = [1, 1]} : vector<32x256xf32> to vector<16x256xf32>
    %48 = vector.extract_strided_slice %46 {offsets = [16, 0], sizes = [16, 256], strides = [1, 1]} : vector<32x256xf32> to vector<16x256xf32>
    %49 = arith.subf %27, %48 : vector<16x256xf32>
    %cst_31 = arith.constant 0.000000e+00 : f32
    %50 = vector.broadcast %cst_31 : f32 to vector<16x256xf32>
    %51 = arith.subf %50, %47 : vector<16x256xf32>
    %52 = math.exp %51 : vector<16x256xf32>
    %53 = arith.mulf %49, %52 : vector<16x256xf32>
    %54 = arith.addf %28, %47 : vector<16x256xf32>
    %c2 = arith.constant 2 : index
    %c0_32 = arith.constant 0 : index
    %c0_33 = arith.constant 0 : index
    %55 = vector.load %arg2[%c2, %c0_32, %c0_33] : memref<4x64x16xbf16, #tpu.memory_space<vmem>>, vector<1x64x16xbf16>
    %56 = vector.shape_cast %55 : vector<1x64x16xbf16> to vector<64x16xbf16>
    %57 = arith.truncf %53 : vector<16x256xf32> to vector<16x256xbf16>
    %cst_34 = arith.constant dense<0.000000e+00> : vector<64x256xf32>
    %58 = tpu.matmul %56, %57, %cst_34 {dimension_numbers = #tpu.dot_dimension_numbers<[1], [0], [0], [1], [0, 0, 1, 1], [], []>} : vector<64x16xbf16>, vector<16x256xbf16>, vector<64x256xf32> -> vector<64x256xf32>
    %c2_35 = arith.constant 2 : index
    %c0_36 = arith.constant 0 : index
    %c0_37 = arith.constant 0 : index
    %59 = vector.load %arg3[%c2_35, %c0_36, %c0_37] : memref<4x64x1xf32, #tpu.memory_space<vmem>>, vector<1x64x1xf32>
    %60 = vector.shape_cast %59 : vector<1x64x1xf32> to vector<64x1xf32>
    %61 = vector.broadcast %60 : vector<64x1xf32> to vector<64x256xf32>
    %62 = arith.addf %58, %61 : vector<64x256xf32>
    %cst_38 = arith.constant 0.000000e+00 : f32
    %63 = vector.broadcast %cst_38 : f32 to vector<64x256xf32>
    %64 = arith.maximumf %62, %63 : vector<64x256xf32>
    %c2_39 = arith.constant 2 : index
    %c0_40 = arith.constant 0 : index
    %c0_41 = arith.constant 0 : index
    %65 = vector.load %arg4[%c2_39, %c0_40, %c0_41] : memref<4x32x64xbf16, #tpu.memory_space<vmem>>, vector<1x32x64xbf16>
    %66 = vector.shape_cast %65 : vector<1x32x64xbf16> to vector<32x64xbf16>
    %67 = arith.truncf %64 : vector<64x256xf32> to vector<64x256xbf16>
    %cst_42 = arith.constant dense<0.000000e+00> : vector<32x256xf32>
    %68 = tpu.matmul %66, %67, %cst_42 {dimension_numbers = #tpu.dot_dimension_numbers<[1], [0], [0], [1], [0, 0, 1, 1], [], []>} : vector<32x64xbf16>, vector<64x256xbf16>, vector<32x256xf32> -> vector<32x256xf32>
    %c2_43 = arith.constant 2 : index
    %c0_44 = arith.constant 0 : index
    %c0_45 = arith.constant 0 : index
    %69 = vector.load %arg5[%c2_43, %c0_44, %c0_45] : memref<4x32x1xf32, #tpu.memory_space<vmem>>, vector<1x32x1xf32>
    %70 = vector.shape_cast %69 : vector<1x32x1xf32> to vector<32x1xf32>
    %71 = vector.broadcast %70 : vector<32x1xf32> to vector<32x256xf32>
    %72 = arith.addf %68, %71 : vector<32x256xf32>
    %73 = vector.extract_strided_slice %72 {offsets = [0, 0], sizes = [16, 256], strides = [1, 1]} : vector<32x256xf32> to vector<16x256xf32>
    %74 = vector.extract_strided_slice %72 {offsets = [16, 0], sizes = [16, 256], strides = [1, 1]} : vector<32x256xf32> to vector<16x256xf32>
    %75 = arith.subf %53, %74 : vector<16x256xf32>
    %cst_46 = arith.constant 0.000000e+00 : f32
    %76 = vector.broadcast %cst_46 : f32 to vector<16x256xf32>
    %77 = arith.subf %76, %73 : vector<16x256xf32>
    %78 = math.exp %77 : vector<16x256xf32>
    %79 = arith.mulf %75, %78 : vector<16x256xf32>
    %80 = arith.addf %54, %73 : vector<16x256xf32>
    %c3 = arith.constant 3 : index
    %c0_47 = arith.constant 0 : index
    %c0_48 = arith.constant 0 : index
    %81 = vector.load %arg2[%c3, %c0_47, %c0_48] : memref<4x64x16xbf16, #tpu.memory_space<vmem>>, vector<1x64x16xbf16>
    %82 = vector.shape_cast %81 : vector<1x64x16xbf16> to vector<64x16xbf16>
    %83 = arith.truncf %79 : vector<16x256xf32> to vector<16x256xbf16>
    %cst_49 = arith.constant dense<0.000000e+00> : vector<64x256xf32>
    %84 = tpu.matmul %82, %83, %cst_49 {dimension_numbers = #tpu.dot_dimension_numbers<[1], [0], [0], [1], [0, 0, 1, 1], [], []>} : vector<64x16xbf16>, vector<16x256xbf16>, vector<64x256xf32> -> vector<64x256xf32>
    %c3_50 = arith.constant 3 : index
    %c0_51 = arith.constant 0 : index
    %c0_52 = arith.constant 0 : index
    %85 = vector.load %arg3[%c3_50, %c0_51, %c0_52] : memref<4x64x1xf32, #tpu.memory_space<vmem>>, vector<1x64x1xf32>
    %86 = vector.shape_cast %85 : vector<1x64x1xf32> to vector<64x1xf32>
    %87 = vector.broadcast %86 : vector<64x1xf32> to vector<64x256xf32>
    %88 = arith.addf %84, %87 : vector<64x256xf32>
    %cst_53 = arith.constant 0.000000e+00 : f32
    %89 = vector.broadcast %cst_53 : f32 to vector<64x256xf32>
    %90 = arith.maximumf %88, %89 : vector<64x256xf32>
    %c3_54 = arith.constant 3 : index
    %c0_55 = arith.constant 0 : index
    %c0_56 = arith.constant 0 : index
    %91 = vector.load %arg4[%c3_54, %c0_55, %c0_56] : memref<4x32x64xbf16, #tpu.memory_space<vmem>>, vector<1x32x64xbf16>
    %92 = vector.shape_cast %91 : vector<1x32x64xbf16> to vector<32x64xbf16>
    %93 = arith.truncf %90 : vector<64x256xf32> to vector<64x256xbf16>
    %cst_57 = arith.constant dense<0.000000e+00> : vector<32x256xf32>
    %94 = tpu.matmul %92, %93, %cst_57 {dimension_numbers = #tpu.dot_dimension_numbers<[1], [0], [0], [1], [0, 0, 1, 1], [], []>} : vector<32x64xbf16>, vector<64x256xbf16>, vector<32x256xf32> -> vector<32x256xf32>
    %c3_58 = arith.constant 3 : index
    %c0_59 = arith.constant 0 : index
    %c0_60 = arith.constant 0 : index
    %95 = vector.load %arg5[%c3_58, %c0_59, %c0_60] : memref<4x32x1xf32, #tpu.memory_space<vmem>>, vector<1x32x1xf32>
    %96 = vector.shape_cast %95 : vector<1x32x1xf32> to vector<32x1xf32>
    %97 = vector.broadcast %96 : vector<32x1xf32> to vector<32x256xf32>
    %98 = arith.addf %94, %97 : vector<32x256xf32>
    %99 = vector.extract_strided_slice %98 {offsets = [0, 0], sizes = [16, 256], strides = [1, 1]} : vector<32x256xf32> to vector<16x256xf32>
    %100 = vector.extract_strided_slice %98 {offsets = [16, 0], sizes = [16, 256], strides = [1, 1]} : vector<32x256xf32> to vector<16x256xf32>
    %101 = arith.subf %79, %100 : vector<16x256xf32>
    %cst_61 = arith.constant 0.000000e+00 : f32
    %102 = vector.broadcast %cst_61 : f32 to vector<16x256xf32>
    %103 = arith.subf %102, %99 : vector<16x256xf32>
    %104 = math.exp %103 : vector<16x256xf32>
    %105 = arith.mulf %101, %104 : vector<16x256xf32>
    %106 = arith.addf %80, %99 : vector<16x256xf32>
    %cst_62 = arith.constant 5.000000e-01 : f32
    %107 = vector.broadcast %cst_62 : f32 to vector<16x256xf32>
    %108 = arith.mulf %107, %105 : vector<16x256xf32>
    %109 = arith.mulf %108, %105 : vector<16x256xf32>
    %110 = arith.addf %109, %106 : vector<16x256xf32>
    %cst_63 = arith.constant dense<0.000000e+00> : vector<256xf32>
    %111 = vector.multi_reduction <add>, %110, %cst_63 [0] : vector<16x256xf32> to vector<256xf32>
    %112 = vector.shape_cast %111 : vector<256xf32> to vector<1x256xf32>
    %cst_64 = arith.constant 0.000000e+00 : f32
    %113 = vector.broadcast %cst_64 : f32 to vector<1x256xf32>
    %114 = arith.subf %113, %112 : vector<1x256xf32>
    %c0_65 = arith.constant 0 : index
    %c0_66 = arith.constant 0 : index
    %115 = vector.load %arg6[%c0_65, %c0_66] : memref<1x256xf32, #tpu.memory_space<vmem>>, vector<1x256xf32>
    tpu.vector_store %arg6[%c0_65, %c0_66], %114 {strides = array<i32>} : memref<1x256xf32, #tpu.memory_space<vmem>>, vector<1x256xf32>,
    return
  }
  func.func @transform_0(%arg0: i32) -> (i32, i32) {
    %c0_i32 = arith.constant 0 : i32
    %c0_i32_0 = arith.constant 0 : i32
    return %arg0, %c0_i32 : i32, i32
  }
  func.func @transform_1(%arg0: i32) -> (i32, i32, i32) {
    %c0_i32 = arith.constant 0 : i32
    %c0_i32_0 = arith.constant 0 : i32
    %c0_i32_1 = arith.constant 0 : i32
    %c0_i32_2 = arith.constant 0 : i32
    return %c0_i32, %c0_i32_0, %c0_i32_1 : i32, i32, i32
  }
  func.func @transform_2(%arg0: i32) -> (i32, i32, i32) {
    %c0_i32 = arith.constant 0 : i32
    %c0_i32_0 = arith.constant 0 : i32
    %c0_i32_1 = arith.constant 0 : i32
    %c0_i32_2 = arith.constant 0 : i32
    return %c0_i32, %c0_i32_0, %c0_i32_1 : i32, i32, i32
  }
  func.func @transform_3(%arg0: i32) -> (i32, i32, i32) {
    %c0_i32 = arith.constant 0 : i32
    %c0_i32_0 = arith.constant 0 : i32
    %c0_i32_1 = arith.constant 0 : i32
    %c0_i32_2 = arith.constant 0 : i32
    return %c0_i32, %c0_i32_0, %c0_i32_1 : i32, i32, i32
  }
  func.func @transform_4(%arg0: i32) -> (i32, i32, i32) {
    %c0_i32 = arith.constant 0 : i32
    %c0_i32_0 = arith.constant 0 : i32
    %c0_i32_1 = arith.constant 0 : i32
    %c0_i32_2 = arith.constant 0 : i32
    return %c0_i32, %c0_i32_0, %c0_i32_1 : i32, i32, i32
  }
  func.func @transform_5(%arg0: i32) -> (i32, i32) {
    %c0_i32 = arith.constant 0 : i32
    %c0_i32_0 = arith.constant 0 : i32
    return %c0_i32, %arg0 : i32, i32
  }
}

</mosaic_0001>

<llo_original>
// kernel: tpu_custom_call.1
$region0: #{tpu_custom_call.1}
  #allocation0 [shape = 'u32[]', space=smem, size = 0x4, offset = 0x4, fixed_abs, tag = 'smem constant byte address 0x4 - core index']
  #allocation1 [shape = 'u32[144,128]{1,0:T(1,128)}', space=vmem, size = 0x12000, scoped, tag = 'internal scratch']
  %s0 = inlined_call_operand.vmem [shape: f32[256,16], index: 0, kind: input, shape index: {}]
  %s1 = inlined_call_operand.vmem [shape: bf16[4,64,16], index: 1, kind: input, shape index: {}]
  %s2 = inlined_call_operand.vmem [shape: f32[4,64,1], index: 2, kind: input, shape index: {}]
  %s3 = inlined_call_operand.vmem [shape: bf16[4,32,64], index: 3, kind: input, shape index: {}]
  %s4 = inlined_call_operand.vmem [shape: f32[4,32,1], index: 4, kind: input, shape index: {}]
  %s5 = inlined_call_operand.hbm [shape: f32[1,256], index: 5, kind: output, shape index: {}]
  %s6 = sld [smem:[#allocation0]]
  $region30: #{tpu_custom_call.1} parent=0
    _
  %s8 = ssub.s32 1, %s6
  %s9 = scalar_select 0, %s8, %s6
  $region1: #{tpu_custom_call.1} parent=0
    #allocation2 [shape = 'u8[1024]{0}', space=vmem, size = 0x400, scoped, tag = 'output window, operand 0, single buffered']
    #allocation3 [shape = 's32[1]{0}', space=sflag, size = 0x4, scoped, tag = 'scoped memory for tpu_custom_call.1']
    %10 = vsyncpa [#allocation3], 0
    // Predicated region
    $region2: #{tpu_custom_call.1} parent=1 // pred_check
      _
    $region3: #{tpu_custom_call.1} parent=1 // pred_check_branch
      %12 = sbr.rel (0) target = $region5
    $region4: #{tpu_custom_call.1} parent=1 // pred_region
      _
    $region5: #{tpu_custom_call.1} parent=1 // pred_fallthru
      _
    // Predicated region
    $region6: #{tpu_custom_call.1} parent=1 // pred_check
      _
    $region7: #{tpu_custom_call.1} parent=1 // pred_check_branch
      %14 = sbr.rel (0) target = $region9
    $region8: #{tpu_custom_call.1} parent=1 // pred_region
      _
    $region9: #{tpu_custom_call.1} parent=1 // pred_fallthru
      _
    // Predicated region
    $region10: #{tpu_custom_call.1} parent=1 // pred_check
      _
    $region11: #{tpu_custom_call.1} parent=1 // pred_check_branch
      %16 = sbr.rel (0) target = $region13
    $region12: #{tpu_custom_call.1} parent=1 // pred_region
      _
    $region13: #{tpu_custom_call.1} parent=1 // pred_fallthru
      _
    // Predicated region
    $region14: #{tpu_custom_call.1} parent=1 // pred_check
      _
    $region15: #{tpu_custom_call.1} parent=1 // pred_check_branch
      %18 = sbr.rel (0) target = $region17
    $region16: #{tpu_custom_call.1} parent=1 // pred_region
      _
    $region17: #{tpu_custom_call.1} parent=1 // pred_fallthru
      _
    // Predicated region
    $region18: #{tpu_custom_call.1} parent=1 // pred_check
      _
    $region19: #{tpu_custom_call.1} parent=1 // pred_check_branch
      %20 = sbr.rel (0) target = $region21
    $region20: #{tpu_custom_call.1} parent=1 // pred_region
      _
    $region21: #{tpu_custom_call.1} parent=1 // pred_fallthru
      _
    %v22 = vld [vmem:[%s0] sm:$0xff]
    %v23 = vld [vmem:[%s0 + $0x8] sm:$0xff]
    %v24 = vld [vmem:[%s0 + $0x10] sm:$0xff]
    %v25 = vld [vmem:[%s0 + $0x18] sm:$0xff]
    %v26 = vld [vmem:[%s0 + $0x20] sm:$0xff]
    %v27 = vld [vmem:[%s0 + $0x28] sm:$0xff]
    %v28 = vld [vmem:[%s0 + $0x30] sm:$0xff]
    %v29 = vld [vmem:[%s0 + $0x38] sm:$0xff]
    %v30 = vld [vmem:[%s0 + $0x40] sm:$0xff]
    %v31 = vld [vmem:[%s0 + $0x48] sm:$0xff]
    %v32 = vld [vmem:[%s0 + $0x50] sm:$0xff]
    %v33 = vld [vmem:[%s0 + $0x58] sm:$0xff]
    %v34 = vld [vmem:[%s0 + $0x60] sm:$0xff]
    %v35 = vld [vmem:[%s0 + $0x68] sm:$0xff]
    %v36 = vld [vmem:[%s0 + $0x70] sm:$0xff]
    %v37 = vld [vmem:[%s0 + $0x78] sm:$0xff]
    %v38 = vld [vmem:[%s0 + $0x80] sm:$0xff]
    %v39 = vld [vmem:[%s0 + $0x88] sm:$0xff]
    %v40 = vld [vmem:[%s0 + $0x90] sm:$0xff]
    %v41 = vld [vmem:[%s0 + $0x98] sm:$0xff]
    %v42 = vld [vmem:[%s0 + $0xa0] sm:$0xff]
    %v43 = vld [vmem:[%s0 + $0xa8] sm:$0xff]
    %v44 = vld [vmem:[%s0 + $0xb0] sm:$0xff]
    %v45 = vld [vmem:[%s0 + $0xb8] sm:$0xff]
    %v46 = vld [vmem:[%s0 + $0xc0] sm:$0xff]
    %v47 = vld [vmem:[%s0 + $0xc8] sm:$0xff]
    %v48 = vld [vmem:[%s0 + $0xd0] sm:$0xff]
    %v49 = vld [vmem:[%s0 + $0xd8] sm:$0xff]
    %v50 = vld [vmem:[%s0 + $0xe0] sm:$0xff]
    %v51 = vld [vmem:[%s0 + $0xe8] sm:$0xff]
    %v52 = vld [vmem:[%s0 + $0xf0] sm:$0xff]
    %v53 = vld [vmem:[%s0 + $0xf8] sm:$0xff]
    %54 = vxpose.xlu0.b32.start [1/16] %v22, 128
    %55 = vxpose.xlu0.b32.cont [2/16] %v23, 128
    %56 = vxpose.xlu0.b32.cont [3/16] %v24, 128
    %57 = vxpose.xlu0.b32.cont [4/16] %v25, 128
    %58 = vxpose.xlu0.b32.cont [5/16] %v26, 128
    %59 = vxpose.xlu0.b32.cont [6/16] %v27, 128
    %60 = vxpose.xlu0.b32.cont [7/16] %v28, 128
    %61 = vxpose.xlu0.b32.cont [8/16] %v29, 128
    %62 = vxpose.xlu0.b32.cont [9/16] %v30, 128
    %63 = vxpose.xlu0.b32.cont [10/16] %v31, 128
    %64 = vxpose.xlu0.b32.cont [11/16] %v32, 128
    %65 = vxpose.xlu0.b32.cont [12/16] %v33, 128
    %66 = vxpose.xlu0.b32.cont [13/16] %v34, 128
    %67 = vxpose.xlu0.b32.cont [14/16] %v35, 128
    %68 = vxpose.xlu0.b32.cont [15/16] %v36, 128
    %69 = vxpose.xlu0.b32.end [16/16] %v37, 128
    %v70 = vpop.trf.xlu0
    %v71 = vpop.trf.xlu0
    %v72 = vpop.trf.xlu0
    %v73 = vpop.trf.xlu0
    %v74 = vpop.trf.xlu0
    %v75 = vpop.trf.xlu0
    %v76 = vpop.trf.xlu0
    %v77 = vpop.trf.xlu0
    %v78 = vpop.trf.xlu0
    %v79 = vpop.trf.xlu0
    %v80 = vpop.trf.xlu0
    %v81 = vpop.trf.xlu0
    %v82 = vpop.trf.xlu0
    %v83 = vpop.trf.xlu0
    %v84 = vpop.trf.xlu0
    %v85 = vpop.trf.xlu0
    %86 = vxpose.xlu0.b32.start [1/16] %v38, 128
    %87 = vxpose.xlu0.b32.cont [2/16] %v39, 128
    %88 = vxpose.xlu0.b32.cont [3/16] %v40, 128
    %89 = vxpose.xlu0.b32.cont [4/16] %v41, 128
    %90 = vxpose.xlu0.b32.cont [5/16] %v42, 128
    %91 = vxpose.xlu0.b32.cont [6/16] %v43, 128
    %92 = vxpose.xlu0.b32.cont [7/16] %v44, 128
    %93 = vxpose.xlu0.b32.cont [8/16] %v45, 128
    %94 = vxpose.xlu0.b32.cont [9/16] %v46, 128
    %95 = vxpose.xlu0.b32.cont [10/16] %v47, 128
    %96 = vxpose.xlu0.b32.cont [11/16] %v48, 128
    %97 = vxpose.xlu0.b32.cont [12/16] %v49, 128
    %98 = vxpose.xlu0.b32.cont [13/16] %v50, 128
    %99 = vxpose.xlu0.b32.cont [14/16] %v51, 128
    %100 = vxpose.xlu0.b32.cont [15/16] %v52, 128
    %101 = vxpose.xlu0.b32.end [16/16] %v53, 128
    %v102 = vpop.trf.xlu0
    %v103 = vpop.trf.xlu0
    %v104 = vpop.trf.xlu0
    %v105 = vpop.trf.xlu0
    %v106 = vpop.trf.xlu0
    %v107 = vpop.trf.xlu0
    %v108 = vpop.trf.xlu0
    %v109 = vpop.trf.xlu0
    %v110 = vpop.trf.xlu0
    %v111 = vpop.trf.xlu0
    %v112 = vpop.trf.xlu0
    %v113 = vpop.trf.xlu0
    %v114 = vpop.trf.xlu0
    %v115 = vpop.trf.xlu0
    %v116 = vpop.trf.xlu0
    %v117 = vpop.trf.xlu0
    %v118 = vld [vmem:[%s1] sm:$0xf]
    %v119 = vld [vmem:[%s1 + $0x4] sm:$0xf]
    %v120 = vld [vmem:[%s1 + $0x8] sm:$0xf]
    %v121 = vld [vmem:[%s1 + $0xc] sm:$0xf]
    %v122 = vld [vmem:[%s1 + $0x10] sm:$0xf]
    %v123 = vld [vmem:[%s1 + $0x14] sm:$0xf]
    %v124 = vld [vmem:[%s1 + $0x18] sm:$0xf]
    %v125 = vld [vmem:[%s1 + $0x1c] sm:$0xf]
    %v126 = vpack.c.bf16 %v71, %v70
    %v127 = vpack.c.bf16 %v103, %v102
    %v128 = vld [vmem:[%s2] sm:$0xff]
    %v129 = vld [vmem:[%s2 + $0x8] sm:$0xff]
    %v130 = vld [vmem:[%s2 + $0x10] sm:$0xff]
    %v131 = vld [vmem:[%s2 + $0x18] sm:$0xff]
    %v132 = vld [vmem:[%s2 + $0x20] sm:$0xff]
    %v133 = vld [vmem:[%s2 + $0x28] sm:$0xff]
    %v134 = vld [vmem:[%s2 + $0x30] sm:$0xff]
    %v135 = vld [vmem:[%s2 + $0x38] sm:$0xff]
    %137 = vset.pattern.permute.xlu0 0
    %138 = vperm.xlu0 %137, %v128
    %v139 = vpop.permute.xlu0 %138
    %142 = vset.pattern.permute.xlu0 0
    %143 = vperm.xlu0 %142, %v129
    %v144 = vpop.permute.xlu0 %143
    %147 = vset.pattern.permute.xlu0 0
    %148 = vperm.xlu0 %147, %v130
    %v149 = vpop.permute.xlu0 %148
    %152 = vset.pattern.permute.xlu0 0
    %153 = vperm.xlu0 %152, %v131
    %v154 = vpop.permute.xlu0 %153
    %157 = vset.pattern.permute.xlu0 0
    %158 = vperm.xlu0 %157, %v132
    %v159 = vpop.permute.xlu0 %158
    %162 = vset.pattern.permute.xlu0 0
    %163 = vperm.xlu0 %162, %v133
    %v164 = vpop.permute.xlu0 %163
    %167 = vset.pattern.permute.xlu0 0
    %168 = vperm.xlu0 %167, %v134
    %v169 = vpop.permute.xlu0 %168
    %172 = vset.pattern.permute.xlu0 0
    %173 = vperm.xlu0 %172, %v135
    %v174 = vpop.permute.xlu0 %173
    %v184 = vunpack.c.l.b16 %v118
    %v185 = vunpack.c.l.b16 %v119
    %v186 = vunpack.c.l.b16 %v120
    %v187 = vunpack.c.l.b16 %v121
    %v188 = vunpack.c.l.b16 %v122
    %v189 = vunpack.c.l.b16 %v123
    %v190 = vunpack.c.l.b16 %v124
    %v191 = vunpack.c.l.b16 %v125
    %v192 = vpack.c.b16 %v185, %v184
    %v193 = vpack.c.b16 %v187, %v186
    %v194 = vpack.c.b16 %v189, %v188
    %v195 = vpack.c.b16 %v191, %v190
    %vm196 = vcmask 130048
    %v198 = vsel %vm196, %v192, 0
    %v201 = vsel %vm196, %v193, 0
    %v204 = vsel %vm196, %v194, 0
    %v207 = vsel %vm196, %v195, 0
    %209 = vmatprep.subr.bf16.mxu0 %v127
    %210 = vmatpush1.bf16.msra.mxu0 %v126
    %211 = vmatprep.subr.bf16.mxu0 0
    %212 = vmatpush1.bf16.msra.mxu0 0
    %213 = vmatprep.subr.bf16.mxu0 0
    %214 = vmatpush1.bf16.msra.mxu0 0
    %215 = vmatprep.subr.bf16.mxu0 0
    %216 = vmatpush1.bf16.msra.mxu0 0
    %217 = vmatprep.subr.bf16.mxu0 0
    %218 = vmatpush1.bf16.msra.mxu0 0
    %219 = vmatprep.subr.bf16.mxu0 0
    %220 = vmatpush1.bf16.msra.mxu0 0
    %221 = vmatprep.subr.bf16.mxu0 0
    %222 = vmatpush1.bf16.msra.mxu0 0
    %223 = vmatprep.subr.bf16.mxu0 0
    %224 = vmatpush1.bf16.msra.mxu0 0
    %225 = vmatprep.subr.bf16.mxu0 0
    %226 = vmatpush1.bf16.msra.mxu0 0
    %227 = vmatprep.subr.bf16.mxu0 0
    %228 = vmatpush1.bf16.msra.mxu0 0
    %229 = vmatprep.subr.bf16.mxu0 0
    %230 = vmatpush1.bf16.msra.mxu0 0
    %231 = vmatprep.subr.bf16.mxu0 0
    %232 = vmatpush1.bf16.msra.mxu0 0
    %233 = vmatprep.subr.bf16.mxu0 0
    %234 = vmatpush1.bf16.msra.mxu0 0
    %235 = vmatprep.subr.bf16.mxu0 0
    %236 = vmatpush1.bf16.msra.mxu0 0
    %237 = vmatprep.subr.bf16.mxu0 0
    %238 = vmatpush1.bf16.msra.mxu0 0
    %239 = vmatprep.subr.bf16.mxu0 0
    %240 = vmatpush1.bf16.msra.mxu0 0
    %241 = vmatprep.mubr.bf16.mxu0 0
    %242 = vmatmul.mubr.bf16.gmra.mrb[0].mxu0 %v198
    %v243 = vpop.f32.mrb[0].mxu0
    %v244 = vadd.f32 %v139, %v243
    %v245 = vpop.f32.mrb[0].mxu0
    %v246 = vadd.f32 %v139, %v245
    %v247 = vpop.f32.mrb[0].mxu0
    %v248 = vadd.f32 %v144, %v247
    %v249 = vpop.f32.mrb[0].mxu0
    %v250 = vadd.f32 %v144, %v249
    %251 = vmatprep.mubr.bf16.mxu0 0
    %252 = vmatmul.mubr.bf16.gmra.mrb[0].mxu0 %v201
    %v253 = vpop.f32.mrb[0].mxu0
    %v254 = vadd.f32 %v149, %v253
    %v255 = vpop.f32.mrb[0].mxu0
    %v256 = vadd.f32 %v149, %v255
    %v257 = vpop.f32.mrb[0].mxu0
    %v258 = vadd.f32 %v154, %v257
    %v259 = vpop.f32.mrb[0].mxu0
    %v260 = vadd.f32 %v154, %v259
    %261 = vmatprep.mubr.bf16.mxu0 0
    %262 = vmatmul.mubr.bf16.gmra.mrb[0].mxu0 %v204
    %v263 = vpop.f32.mrb[0].mxu0
    %v264 = vadd.f32 %v159, %v263
    %v265 = vpop.f32.mrb[0].mxu0
    %v266 = vadd.f32 %v159, %v265
    %v267 = vpop.f32.mrb[0].mxu0
    %v268 = vadd.f32 %v164, %v267
    %v269 = vpop.f32.mrb[0].mxu0
    %v270 = vadd.f32 %v164, %v269
    %271 = vmatprep.mubr.bf16.mxu0 0
    %272 = vmatmul.mubr.bf16.gmra.mrb[0].mxu0 %v207
    %v273 = vpop.f32.mrb[0].mxu0
    %v274 = vadd.f32 %v169, %v273
    %v275 = vpop.f32.mrb[0].mxu0
    %v276 = vadd.f32 %v169, %v275
    %v277 = vpop.f32.mrb[0].mxu0
    %v278 = vadd.f32 %v174, %v277
    %v279 = vpop.f32.mrb[0].mxu0
    %v280 = vadd.f32 %v174, %v279
    %281 = vdwg.mxu0
    %v282 = vmax.f32 %v244, 0.0
    %v283 = vmax.f32 %v246, 0.0
    %v284 = vmax.f32 %v248, 0.0
    %v285 = vmax.f32 %v250, 0.0
    %v286 = vmax.f32 %v254, 0.0
    %v287 = vmax.f32 %v256, 0.0
    %v288 = vmax.f32 %v258, 0.0
    %v289 = vmax.f32 %v260, 0.0
    %v290 = vmax.f32 %v264, 0.0
    %v291 = vmax.f32 %v266, 0.0
    %v292 = vmax.f32 %v268, 0.0
    %v293 = vmax.f32 %v270, 0.0
    %v294 = vmax.f32 %v274, 0.0
    %v295 = vmax.f32 %v276, 0.0
    %v296 = vmax.f32 %v278, 0.0
    %v297 = vmax.f32 %v280, 0.0
    %v298 = vld [vmem:[%s3] sm:$0xf]
    %v299 = vld [vmem:[%s3 + $0x4] sm:$0xf]
    %v300 = vld [vmem:[%s3 + $0x8] sm:$0xf]
    %v301 = vld [vmem:[%s3 + $0xc] sm:$0xf]
    %v302 = vpack.c.bf16 %v284, %v282
    %v303 = vpack.c.bf16 %v285, %v283
    %v304 = vpack.c.bf16 %v288, %v286
    %v305 = vpack.c.bf16 %v289, %v287
    %v306 = vpack.c.bf16 %v292, %v290
    %v307 = vpack.c.bf16 %v293, %v291
    %v308 = vpack.c.bf16 %v296, %v294
    %v309 = vpack.c.bf16 %v297, %v295
    %v310 = vld [vmem:[%s4] sm:$0xff]
    %v311 = vld [vmem:[%s4 + $0x8] sm:$0xff]
    %v312 = vld [vmem:[%s4 + $0x10] sm:$0xff]
    %v313 = vld [vmem:[%s4 + $0x18] sm:$0xff]
    %315 = vset.pattern.permute.xlu0 0
    %316 = vperm.xlu0 %315, %v310
    %v317 = vpop.permute.xlu0 %316
    %320 = vset.pattern.permute.xlu0 0
    %321 = vperm.xlu0 %320, %v311
    %v322 = vpop.permute.xlu0 %321
    %325 = vset.pattern.permute.xlu0 0
    %326 = vperm.xlu0 %325, %v312
    %v327 = vpop.permute.xlu0 %326
    %330 = vset.pattern.permute.xlu0 0
    %331 = vperm.xlu0 %330, %v313
    %v332 = vpop.permute.xlu0 %331
    %v338 = vunpack.c.l.b16 %v298
    %v339 = vunpack.c.l.b16 %v299
    %v340 = vunpack.c.l.b16 %v300
    %v341 = vunpack.c.l.b16 %v301
    %v342 = vpack.c.b16 %v339, %v338
    %v343 = vpack.c.b16 %v341, %v340
    %vm344 = vcmask 523264
    %v346 = vsel %vm344, %v342, 0
    %v349 = vsel %vm344, %v343, 0
    %351 = vmatprep.subr.bf16.mxu0 %v303
    %352 = vmatpush1.bf16.msra.mxu0 %v302
    %353 = vmatprep.subr.bf16.mxu0 %v305
    %354 = vmatpush1.bf16.msra.mxu0 %v304
    %355 = vmatprep.subr.bf16.mxu0 %v307
    %356 = vmatpush1.bf16.msra.mxu0 %v306
    %357 = vmatprep.subr.bf16.mxu0 %v309
    %358 = vmatpush1.bf16.msra.mxu0 %v308
    %359 = vmatprep.subr.bf16.mxu0 0
    %360 = vmatpush1.bf16.msra.mxu0 0
    %361 = vmatprep.subr.bf16.mxu0 0
    %362 = vmatpush1.bf16.msra.mxu0 0
    %363 = vmatprep.subr.bf16.mxu0 0
    %364 = vmatpush1.bf16.msra.mxu0 0
    %365 = vmatprep.subr.bf16.mxu0 0
    %366 = vmatpush1.bf16.msra.mxu0 0
    %367 = vmatprep.subr.bf16.mxu0 0
    %368 = vmatpush1.bf16.msra.mxu0 0
    %369 = vmatprep.subr.bf16.mxu0 0
    %370 = vmatpush1.bf16.msra.mxu0 0
    %371 = vmatprep.subr.bf16.mxu0 0
    %372 = vmatpush1.bf16.msra.mxu0 0
    %373 = vmatprep.subr.bf16.mxu0 0
    %374 = vmatpush1.bf16.msra.mxu0 0
    %375 = vmatprep.subr.bf16.mxu0 0
    %376 = vmatpush1.bf16.msra.mxu0 0
    %377 = vmatprep.subr.bf16.mxu0 0
    %378 = vmatpush1.bf16.msra.mxu0 0
    %379 = vmatprep.subr.bf16.mxu0 0
    %380 = vmatpush1.bf16.msra.mxu0 0
    %381 = vmatprep.subr.bf16.mxu0 0
    %382 = vmatpush1.bf16.msra.mxu0 0
    %383 = vmatprep.mubr.bf16.mxu0 0
    %384 = vmatmul.mubr.bf16.gmra.mrb[0].mxu0 %v346
    %v385 = vpop.f32.mrb[0].mxu0
    %v386 = vadd.f32 %v317, %v385
    %v387 = vpop.f32.mrb[0].mxu0
    %v388 = vadd.f32 %v317, %v387
    %v389 = vpop.f32.mrb[0].mxu0
    %v390 = vadd.f32 %v322, %v389
    %v391 = vpop.f32.mrb[0].mxu0
    %v392 = vadd.f32 %v322, %v391
    %393 = vmatprep.mubr.bf16.mxu0 0
    %394 = vmatmul.mubr.bf16.gmra.mrb[0].mxu0 %v349
    %v395 = vpop.f32.mrb[0].mxu0
    %v396 = vadd.f32 %v327, %v395
    %v397 = vpop.f32.mrb[0].mxu0
    %v398 = vadd.f32 %v327, %v397
    %v399 = vpop.f32.mrb[0].mxu0
    %v400 = vadd.f32 %v332, %v399
    %v401 = vpop.f32.mrb[0].mxu0
    %v402 = vadd.f32 %v332, %v401
    %403 = vdwg.mxu0
    %v404 = vsub.f32 %v70, %v396
    %v405 = vsub.f32 %v102, %v398
    %v406 = vsub.f32 %v71, %v400
    %v407 = vsub.f32 %v103, %v402
    %v408 = vsub.f32 0.0, %v386
    %v409 = vsub.f32 0.0, %v388
    %v410 = vsub.f32 0.0, %v390
    %v411 = vsub.f32 0.0, %v392
    %v412 = vmul.f32 %v408, 1.442695
    %v413 = vpow.pop %v412
    %v414 = vmul.f32 %v409, 1.442695
    %v415 = vpow.pop %v414
    %v416 = vmul.f32 %v410, 1.442695
    %v417 = vpow.pop %v416
    %v418 = vmul.f32 %v411, 1.442695
    %v419 = vpow.pop %v418
    %v420 = vmul.f32 %v404, %v413
    %v421 = vmul.f32 %v405, %v415
    %v422 = vmul.f32 %v406, %v417
    %v423 = vmul.f32 %v407, %v419
    %v424 = vadd.f32 %v386, 0.0
    %v425 = vadd.f32 %v388, 0.0
    %v426 = vadd.f32 %v390, 0.0
    %v427 = vadd.f32 %v392, 0.0
    %s428 = scalar_lea.vmem %s1, 32
    %v429 = vld [vmem:[%s428] sm:$0xf]
    %v430 = vld [vmem:[%s428 + $0x4] sm:$0xf]
    %v431 = vld [vmem:[%s428 + $0x8] sm:$0xf]
    %v432 = vld [vmem:[%s428 + $0xc] sm:$0xf]
    %v433 = vld [vmem:[%s428 + $0x10] sm:$0xf]
    %v434 = vld [vmem:[%s428 + $0x14] sm:$0xf]
    %v435 = vld [vmem:[%s428 + $0x18] sm:$0xf]
    %v436 = vld [vmem:[%s428 + $0x1c] sm:$0xf]
    %v437 = vpack.c.bf16 %v422, %v420
    %v438 = vpack.c.bf16 %v423, %v421
    %s439 = scalar_lea.vmem %s2, 64
    %v440 = vld [vmem:[%s439] sm:$0xff]
    %v441 = vld [vmem:[%s439 + $0x8] sm:$0xff]
    %v442 = vld [vmem:[%s439 + $0x10] sm:$0xff]
    %v443 = vld [vmem:[%s439 + $0x18] sm:$0xff]
    %v444 = vld [vmem:[%s439 + $0x20] sm:$0xff]
    %v445 = vld [vmem:[%s439 + $0x28] sm:$0xff]
    %v446 = vld [vmem:[%s439 + $0x30] sm:$0xff]
    %v447 = vld [vmem:[%s439 + $0x38] sm:$0xff]
    %449 = vset.pattern.permute.xlu0 0
    %450 = vperm.xlu0 %449, %v440
    %v451 = vpop.permute.xlu0 %450
    %454 = vset.pattern.permute.xlu0 0
    %455 = vperm.xlu0 %454, %v441
    %v456 = vpop.permute.xlu0 %455
    %459 = vset.pattern.permute.xlu0 0
    %460 = vperm.xlu0 %459, %v442
    %v461 = vpop.permute.xlu0 %460
    %464 = vset.pattern.permute.xlu0 0
    %465 = vperm.xlu0 %464, %v443
    %v466 = vpop.permute.xlu0 %465
    %469 = vset.pattern.permute.xlu0 0
    %470 = vperm.xlu0 %469, %v444
    %v471 = vpop.permute.xlu0 %470
    %474 = vset.pattern.permute.xlu0 0
    %475 = vperm.xlu0 %474, %v445
    %v476 = vpop.permute.xlu0 %475
    %479 = vset.pattern.permute.xlu0 0
    %480 = vperm.xlu0 %479, %v446
    %v481 = vpop.permute.xlu0 %480
    %484 = vset.pattern.permute.xlu0 0
    %485 = vperm.xlu0 %484, %v447
    %v486 = vpop.permute.xlu0 %485
    %v496 = vunpack.c.l.b16 %v429
    %v497 = vunpack.c.l.b16 %v430
    %v498 = vunpack.c.l.b16 %v431
    %v499 = vunpack.c.l.b16 %v432
    %v500 = vunpack.c.l.b16 %v433
    %v501 = vunpack.c.l.b16 %v434
    %v502 = vunpack.c.l.b16 %v435
    %v503 = vunpack.c.l.b16 %v436
    %v504 = vpack.c.b16 %v497, %v496
    %v505 = vpack.c.b16 %v499, %v498
    %v506 = vpack.c.b16 %v501, %v500
    %v507 = vpack.c.b16 %v503, %v502
    %v509 = vsel %vm196, %v504, 0
    %v512 = vsel %vm196, %v505, 0
    %v515 = vsel %vm196, %v506, 0
    %v518 = vsel %vm196, %v507, 0
    %520 = vmatprep.subr.bf16.mxu0 %v438
    %521 = vmatpush1.bf16.msra.mxu0 %v437
    %522 = vmatprep.subr.bf16.mxu0 0
    %523 = vmatpush1.bf16.msra.mxu0 0
    %524 = vmatprep.subr.bf16.mxu0 0
    %525 = vmatpush1.bf16.msra.mxu0 0
    %526 = vmatprep.subr.bf16.mxu0 0
    %527 = vmatpush1.bf16.msra.mxu0 0
    %528 = vmatprep.subr.bf16.mxu0 0
    %529 = vmatpush1.bf16.msra.mxu0 0
    %530 = vmatprep.subr.bf16.mxu0 0
    %531 = vmatpush1.bf16.msra.mxu0 0
    %532 = vmatprep.subr.bf16.mxu0 0
    %533 = vmatpush1.bf16.msra.mxu0 0
    %534 = vmatprep.subr.bf16.mxu0 0
    %535 = vmatpush1.bf16.msra.mxu0 0
    %536 = vmatprep.subr.bf16.mxu0 0
    %537 = vmatpush1.bf16.msra.mxu0 0
    %538 = vmatprep.subr.bf16.mxu0 0
    %539 = vmatpush1.bf16.msra.mxu0 0
    %540 = vmatprep.subr.bf16.mxu0 0
    %541 = vmatpush1.bf16.msra.mxu0 0
    %542 = vmatprep.subr.bf16.mxu0 0
    %543 = vmatpush1.bf16.msra.mxu0 0
    %544 = vmatprep.subr.bf16.mxu0 0
    %545 = vmatpush1.bf16.msra.mxu0 0
    %546 = vmatprep.subr.bf16.mxu0 0
    %547 = vmatpush1.bf16.msra.mxu0 0
    %548 = vmatprep.subr.bf16.mxu0 0
    %549 = vmatpush1.bf16.msra.mxu0 0
    %550 = vmatprep.subr.bf16.mxu0 0
    %551 = vmatpush1.bf16.msra.mxu0 0
    %552 = vmatprep.mubr.bf16.mxu0 0
    %553 = vmatmul.mubr.bf16.gmra.mrb[0].mxu0 %v509
    %v554 = vpop.f32.mrb[0].mxu0
    %v555 = vadd.f32 %v451, %v554
    %v556 = vpop.f32.mrb[0].mxu0
    %v557 = vadd.f32 %v451, %v556
    %v558 = vpop.f32.mrb[0].mxu0
    %v559 = vadd.f32 %v456, %v558
    %v560 = vpop.f32.mrb[0].mxu0
    %v561 = vadd.f32 %v456, %v560
    %562 = vmatprep.mubr.bf16.mxu0 0
    %563 = vmatmul.mubr.bf16.gmra.mrb[0].mxu0 %v512
    %v564 = vpop.f32.mrb[0].mxu0
    %v565 = vadd.f32 %v461, %v564
    %v566 = vpop.f32.mrb[0].mxu0
    %v567 = vadd.f32 %v461, %v566
    %v568 = vpop.f32.mrb[0].mxu0
    %v569 = vadd.f32 %v466, %v568
    %v570 = vpop.f32.mrb[0].mxu0
    %v571 = vadd.f32 %v466, %v570
    %572 = vmatprep.mubr.bf16.mxu0 0
    %573 = vmatmul.mubr.bf16.gmra.mrb[0].mxu0 %v515
    %v574 = vpop.f32.mrb[0].mxu0
    %v575 = vadd.f32 %v471, %v574
    %v576 = vpop.f32.mrb[0].mxu0
    %v577 = vadd.f32 %v471, %v576
    %v578 = vpop.f32.mrb[0].mxu0
    %v579 = vadd.f32 %v476, %v578
    %v580 = vpop.f32.mrb[0].mxu0
    %v581 = vadd.f32 %v476, %v580
    %582 = vmatprep.mubr.bf16.mxu0 0
    %583 = vmatmul.mubr.bf16.gmra.mrb[0].mxu0 %v518
    %v584 = vpop.f32.mrb[0].mxu0
    %v585 = vadd.f32 %v481, %v584
    %v586 = vpop.f32.mrb[0].mxu0
    %v587 = vadd.f32 %v481, %v586
    %v588 = vpop.f32.mrb[0].mxu0
    %v589 = vadd.f32 %v486, %v588
    %v590 = vpop.f32.mrb[0].mxu0
    %v591 = vadd.f32 %v486, %v590
    %592 = vdwg.mxu0
    %v593 = vmax.f32 %v555, 0.0
    %v594 = vmax.f32 %v557, 0.0
    %v595 = vmax.f32 %v559, 0.0
    %v596 = vmax.f32 %v561, 0.0
    %v597 = vmax.f32 %v565, 0.0
    %v598 = vmax.f32 %v567, 0.0
    %v599 = vmax.f32 %v569, 0.0
    %v600 = vmax.f32 %v571, 0.0
    %v601 = vmax.f32 %v575, 0.0
    %v602 = vmax.f32 %v577, 0.0
    %v603 = vmax.f32 %v579, 0.0
    %v604 = vmax.f32 %v581, 0.0
    %v605 = vmax.f32 %v585, 0.0
    %v606 = vmax.f32 %v587, 0.0
    %v607 = vmax.f32 %v589, 0.0
    %v608 = vmax.f32 %v591, 0.0
    %s609 = scalar_lea.vmem %s3, 16
    %v610 = vld [vmem:[%s609] sm:$0xf]
    %v611 = vld [vmem:[%s609 + $0x4] sm:$0xf]
    %v612 = vld [vmem:[%s609 + $0x8] sm:$0xf]
    %v613 = vld [vmem:[%s609 + $0xc] sm:$0xf]
    %v614 = vpack.c.bf16 %v595, %v593
    %v615 = vpack.c.bf16 %v596, %v594
    %v616 = vpack.c.bf16 %v599, %v597
    %v617 = vpack.c.bf16 %v600, %v598
    %v618 = vpack.c.bf16 %v603, %v601
    %v619 = vpack.c.bf16 %v604, %v602
    %v620 = vpack.c.bf16 %v607, %v605
    %v621 = vpack.c.bf16 %v608, %v606
    %s622 = scalar_lea.vmem %s4, 32
    %v623 = vld [vmem:[%s622] sm:$0xff]
    %v624 = vld [vmem:[%s622 + $0x8] sm:$0xff]
    %v625 = vld [vmem:[%s622 + $0x10] sm:$0xff]
    %v626 = vld [vmem:[%s622 + $0x18] sm:$0xff]
    %628 = vset.pattern.permute.xlu0 0
    %629 = vperm.xlu0 %628, %v623
    %v630 = vpop.permute.xlu0 %629
    %633 = vset.pattern.permute.xlu0 0
    %634 = vperm.xlu0 %633, %v624
    %v635 = vpop.permute.xlu0 %634
    %638 = vset.pattern.permute.xlu0 0
    %639 = vperm.xlu0 %638, %v625
    %v640 = vpop.permute.xlu0 %639
    %643 = vset.pattern.permute.xlu0 0
    %644 = vperm.xlu0 %643, %v626
    %v645 = vpop.permute.xlu0 %644
    %v651 = vunpack.c.l.b16 %v610
    %v652 = vunpack.c.l.b16 %v611
    %v653 = vunpack.c.l.b16 %v612
    %v654 = vunpack.c.l.b16 %v613
    %v655 = vpack.c.b16 %v652, %v651
    %v656 = vpack.c.b16 %v654, %v653
    %v658 = vsel %vm344, %v655, 0
    %v661 = vsel %vm344, %v656, 0
    %663 = vmatprep.subr.bf16.mxu0 %v615
    %664 = vmatpush1.bf16.msra.mxu0 %v614
    %665 = vmatprep.subr.bf16.mxu0 %v617
    %666 = vmatpush1.bf16.msra.mxu0 %v616
    %667 = vmatprep.subr.bf16.mxu0 %v619
    %668 = vmatpush1.bf16.msra.mxu0 %v618
    %669 = vmatprep.subr.bf16.mxu0 %v621
    %670 = vmatpush1.bf16.msra.mxu0 %v620
    %671 = vmatprep.subr.bf16.mxu0 0
    %672 = vmatpush1.bf16.msra.mxu0 0
    %673 = vmatprep.subr.bf16.mxu0 0
    %674 = vmatpush1.bf16.msra.mxu0 0
    %675 = vmatprep.subr.bf16.mxu0 0
    %676 = vmatpush1.bf16.msra.mxu0 0
    %677 = vmatprep.subr.bf16.mxu0 0
    %678 = vmatpush1.bf16.msra.mxu0 0
    %679 = vmatprep.subr.bf16.mxu0 0
    %680 = vmatpush1.bf16.msra.mxu0 0
    %681 = vmatprep.subr.bf16.mxu0 0
    %682 = vmatpush1.bf16.msra.mxu0 0
    %683 = vmatprep.subr.bf16.mxu0 0
    %684 = vmatpush1.bf16.msra.mxu0 0
    %685 = vmatprep.subr.bf16.mxu0 0
    %686 = vmatpush1.bf16.msra.mxu0 0
    %687 = vmatprep.subr.bf16.mxu0 0
    %688 = vmatpush1.bf16.msra.mxu0 0
    %689 = vmatprep.subr.bf16.mxu0 0
    %690 = vmatpush1.bf16.msra.mxu0 0
    %691 = vmatprep.subr.bf16.mxu0 0
    %692 = vmatpush1.bf16.msra.mxu0 0
    %693 = vmatprep.subr.bf16.mxu0 0
    %694 = vmatpush1.bf16.msra.mxu0 0
    %695 = vmatprep.mubr.bf16.mxu0 0
    %696 = vmatmul.mubr.bf16.gmra.mrb[0].mxu0 %v658
    %v697 = vpop.f32.mrb[0].mxu0
    %v698 = vadd.f32 %v630, %v697
    %v699 = vpop.f32.mrb[0].mxu0
    %v700 = vadd.f32 %v630, %v699
    %v701 = vpop.f32.mrb[0].mxu0
    %v702 = vadd.f32 %v635, %v701
    %v703 = vpop.f32.mrb[0].mxu0
    %v704 = vadd.f32 %v635, %v703
    %705 = vmatprep.mubr.bf16.mxu0 0
    %706 = vmatmul.mubr.bf16.gmra.mrb[0].mxu0 %v661
    %v707 = vpop.f32.mrb[0].mxu0
    %v708 = vadd.f32 %v640, %v707
    %v709 = vpop.f32.mrb[0].mxu0
    %v710 = vadd.f32 %v640, %v709
    %v711 = vpop.f32.mrb[0].mxu0
    %v712 = vadd.f32 %v645, %v711
    %v713 = vpop.f32.mrb[0].mxu0
    %v714 = vadd.f32 %v645, %v713
    %715 = vdwg.mxu0
    %v716 = vsub.f32 %v420, %v708
    %v717 = vsub.f32 %v421, %v710
    %v718 = vsub.f32 %v422, %v712
    %v719 = vsub.f32 %v423, %v714
    %v720 = vsub.f32 0.0, %v698
    %v721 = vsub.f32 0.0, %v700
    %v722 = vsub.f32 0.0, %v702
    %v723 = vsub.f32 0.0, %v704
    %v724 = vmul.f32 %v720, 1.442695
    %v725 = vpow.pop %v724
    %v726 = vmul.f32 %v721, 1.442695
    %v727 = vpow.pop %v726
    %v728 = vmul.f32 %v722, 1.442695
    %v729 = vpow.pop %v728
    %v730 = vmul.f32 %v723, 1.442695
    %v731 = vpow.pop %v730
    %v732 = vmul.f32 %v716, %v725
    %v733 = vmul.f32 %v717, %v727
    %v734 = vmul.f32 %v718, %v729
    %v735 = vmul.f32 %v719, %v731
    %v736 = vadd.f32 %v424, %v698
    %v737 = vadd.f32 %v425, %v700
    %v738 = vadd.f32 %v426, %v702
    %v739 = vadd.f32 %v427, %v704
    %s740 = scalar_lea.vmem %s1, 64
    %v741 = vld [vmem:[%s740] sm:$0xf]
    %v742 = vld [vmem:[%s740 + $0x4] sm:$0xf]
    %v743 = vld [vmem:[%s740 + $0x8] sm:$0xf]
    %v744 = vld [vmem:[%s740 + $0xc] sm:$0xf]
    %v745 = vld [vmem:[%s740 + $0x10] sm:$0xf]
    %v746 = vld [vmem:[%s740 + $0x14] sm:$0xf]
    %v747 = vld [vmem:[%s740 + $0x18] sm:$0xf]
    %v748 = vld [vmem:[%s740 + $0x1c] sm:$0xf]
    %v749 = vpack.c.bf16 %v734, %v732
    %v750 = vpack.c.bf16 %v735, %v733
    %s751 = scalar_lea.vmem %s2, 128
    %v752 = vld [vmem:[%s751] sm:$0xff]
    %v753 = vld [vmem:[%s751 + $0x8] sm:$0xff]
    %v754 = vld [vmem:[%s751 + $0x10] sm:$0xff]
    %v755 = vld [vmem:[%s751 + $0x18] sm:$0xff]
    %v756 = vld [vmem:[%s751 + $0x20] sm:$0xff]
    %v757 = vld [vmem:[%s751 + $0x28] sm:$0xff]
    %v758 = vld [vmem:[%s751 + $0x30] sm:$0xff]
    %v759 = vld [vmem:[%s751 + $0x38] sm:$0xff]
    %761 = vset.pattern.permute.xlu0 0
    %762 = vperm.xlu0 %761, %v752
    %v763 = vpop.permute.xlu0 %762
    %766 = vset.pattern.permute.xlu0 0
    %767 = vperm.xlu0 %766, %v753
    %v768 = vpop.permute.xlu0 %767
    %771 = vset.pattern.permute.xlu0 0
    %772 = vperm.xlu0 %771, %v754
    %v773 = vpop.permute.xlu0 %772
    %776 = vset.pattern.permute.xlu0 0
    %777 = vperm.xlu0 %776, %v755
    %v778 = vpop.permute.xlu0 %777
    %781 = vset.pattern.permute.xlu0 0
    %782 = vperm.xlu0 %781, %v756
    %v783 = vpop.permute.xlu0 %782
    %786 = vset.pattern.permute.xlu0 0
    %787 = vperm.xlu0 %786, %v757
    %v788 = vpop.permute.xlu0 %787
    %791 = vset.pattern.permute.xlu0 0
    %792 = vperm.xlu0 %791, %v758
    %v793 = vpop.permute.xlu0 %792
    %796 = vset.pattern.permute.xlu0 0
    %797 = vperm.xlu0 %796, %v759
    %v798 = vpop.permute.xlu0 %797
    %v808 = vunpack.c.l.b16 %v741
    %v809 = vunpack.c.l.b16 %v742
    %v810 = vunpack.c.l.b16 %v743
    %v811 = vunpack.c.l.b16 %v744
    %v812 = vunpack.c.l.b16 %v745
    %v813 = vunpack.c.l.b16 %v746
    %v814 = vunpack.c.l.b16 %v747
    %v815 = vunpack.c.l.b16 %v748
    %v816 = vpack.c.b16 %v809, %v808
    %v817 = vpack.c.b16 %v811, %v810
    %v818 = vpack.c.b16 %v813, %v812
    %v819 = vpack.c.b16 %v815, %v814
    %v821 = vsel %vm196, %v816, 0
    %v824 = vsel %vm196, %v817, 0
    %v827 = vsel %vm196, %v818, 0
    %v830 = vsel %vm196, %v819, 0
    %832 = vmatprep.subr.bf16.mxu0 %v750
    %833 = vmatpush1.bf16.msra.mxu0 %v749
    %834 = vmatprep.subr.bf16.mxu0 0
    %835 = vmatpush1.bf16.msra.mxu0 0
    %836 = vmatprep.subr.bf16.mxu0 0
    %837 = vmatpush1.bf16.msra.mxu0 0
    %838 = vmatprep.subr.bf16.mxu0 0
    %839 = vmatpush1.bf16.msra.mxu0 0
    %840 = vmatprep.subr.bf16.mxu0 0
    %841 = vmatpush1.bf16.msra.mxu0 0
    %842 = vmatprep.subr.bf16.mxu0 0
    %843 = vmatpush1.bf16.msra.mxu0 0
    %844 = vmatprep.subr.bf16.mxu0 0
    %845 = vmatpush1.bf16.msra.mxu0 0
    %846 = vmatprep.subr.bf16.mxu0 0
    %847 = vmatpush1.bf16.msra.mxu0 0
    %848 = vmatprep.subr.bf16.mxu0 0
    %849 = vmatpush1.bf16.msra.mxu0 0
    %850 = vmatprep.subr.bf16.mxu0 0
    %851 = vmatpush1.bf16.msra.mxu0 0
    %852 = vmatprep.subr.bf16.mxu0 0
    %853 = vmatpush1.bf16.msra.mxu0 0
    %854 = vmatprep.subr.bf16.mxu0 0
    %855 = vmatpush1.bf16.msra.mxu0 0
    %856 = vmatprep.subr.bf16.mxu0 0
    %857 = vmatpush1.bf16.msra.mxu0 0
    %858 = vmatprep.subr.bf16.mxu0 0
    %859 = vmatpush1.bf16.msra.mxu0 0
    %860 = vmatprep.subr.bf16.mxu0 0
    %861 = vmatpush1.bf16.msra.mxu0 0
    %862 = vmatprep.subr.bf16.mxu0 0
    %863 = vmatpush1.bf16.msra.mxu0 0
    %864 = vmatprep.mubr.bf16.mxu0 0
    %865 = vmatmul.mubr.bf16.gmra.mrb[0].mxu0 %v821
    %v866 = vpop.f32.mrb[0].mxu0
    %v867 = vadd.f32 %v763, %v866
    %v868 = vpop.f32.mrb[0].mxu0
    %v869 = vadd.f32 %v763, %v868
    %v870 = vpop.f32.mrb[0].mxu0
    %v871 = vadd.f32 %v768, %v870
    %v872 = vpop.f32.mrb[0].mxu0
    %v873 = vadd.f32 %v768, %v872
    %874 = vmatprep.mubr.bf16.mxu0 0
    %875 = vmatmul.mubr.bf16.gmra.mrb[0].mxu0 %v824
    %v876 = vpop.f32.mrb[0].mxu0
    %v877 = vadd.f32 %v773, %v876
    %v878 = vpop.f32.mrb[0].mxu0
    %v879 = vadd.f32 %v773, %v878
    %v880 = vpop.f32.mrb[0].mxu0
    %v881 = vadd.f32 %v778, %v880
    %v882 = vpop.f32.mrb[0].mxu0
    %v883 = vadd.f32 %v778, %v882
    %884 = vmatprep.mubr.bf16.mxu0 0
    %885 = vmatmul.mubr.bf16.gmra.mrb[0].mxu0 %v827
    %v886 = vpop.f32.mrb[0].mxu0
    %v887 = vadd.f32 %v783, %v886
    %v888 = vpop.f32.mrb[0].mxu0
    %v889 = vadd.f32 %v783, %v888
    %v890 = vpop.f32.mrb[0].mxu0
    %v891 = vadd.f32 %v788, %v890
    %v892 = vpop.f32.mrb[0].mxu0
    %v893 = vadd.f32 %v788, %v892
    %894 = vmatprep.mubr.bf16.mxu0 0
    %895 = vmatmul.mubr.bf16.gmra.mrb[0].mxu0 %v830
    %v896 = vpop.f32.mrb[0].mxu0
    %v897 = vadd.f32 %v793, %v896
    %v898 = vpop.f32.mrb[0].mxu0
    %v899 = vadd.f32 %v793, %v898
    %v900 = vpop.f32.mrb[0].mxu0
    %v901 = vadd.f32 %v798, %v900
    %v902 = vpop.f32.mrb[0].mxu0
    %v903 = vadd.f32 %v798, %v902
    %904 = vdwg.mxu0
    %v905 = vmax.f32 %v867, 0.0
    %v906 = vmax.f32 %v869, 0.0
    %v907 = vmax.f32 %v871, 0.0
    %v908 = vmax.f32 %v873, 0.0
    %v909 = vmax.f32 %v877, 0.0
    %v910 = vmax.f32 %v879, 0.0
    %v911 = vmax.f32 %v881, 0.0
    %v912 = vmax.f32 %v883, 0.0
    %v913 = vmax.f32 %v887, 0.0
    %v914 = vmax.f32 %v889, 0.0
    %v915 = vmax.f32 %v891, 0.0
    %v916 = vmax.f32 %v893, 0.0
    %v917 = vmax.f32 %v897, 0.0
    %v918 = vmax.f32 %v899, 0.0
    %v919 = vmax.f32 %v901, 0.0
    %v920 = vmax.f32 %v903, 0.0
    %s921 = scalar_lea.vmem %s3, 32
    %v922 = vld [vmem:[%s921] sm:$0xf]
    %v923 = vld [vmem:[%s921 + $0x4] sm:$0xf]
    %v924 = vld [vmem:[%s921 + $0x8] sm:$0xf]
    %v925 = vld [vmem:[%s921 + $0xc] sm:$0xf]
    %v926 = vpack.c.bf16 %v907, %v905
    %v927 = vpack.c.bf16 %v908, %v906
    %v928 = vpack.c.bf16 %v911, %v909
    %v929 = vpack.c.bf16 %v912, %v910
    %v930 = vpack.c.bf16 %v915, %v913
    %v931 = vpack.c.bf16 %v916, %v914
    %v932 = vpack.c.bf16 %v919, %v917
    %v933 = vpack.c.bf16 %v920, %v918
    %s934 = scalar_lea.vmem %s4, 64
    %v935 = vld [vmem:[%s934] sm:$0xff]
    %v936 = vld [vmem:[%s934 + $0x8] sm:$0xff]
    %v937 = vld [vmem:[%s934 + $0x10] sm:$0xff]
    %v938 = vld [vmem:[%s934 + $0x18] sm:$0xff]
    %940 = vset.pattern.permute.xlu0 0
    %941 = vperm.xlu0 %940, %v935
    %v942 = vpop.permute.xlu0 %941
    %945 = vset.pattern.permute.xlu0 0
    %946 = vperm.xlu0 %945, %v936
    %v947 = vpop.permute.xlu0 %946
    %950 = vset.pattern.permute.xlu0 0
    %951 = vperm.xlu0 %950, %v937
    %v952 = vpop.permute.xlu0 %951
    %955 = vset.pattern.permute.xlu0 0
    %956 = vperm.xlu0 %955, %v938
    %v957 = vpop.permute.xlu0 %956
    %v963 = vunpack.c.l.b16 %v922
    %v964 = vunpack.c.l.b16 %v923
    %v965 = vunpack.c.l.b16 %v924
    %v966 = vunpack.c.l.b16 %v925
    %v967 = vpack.c.b16 %v964, %v963
    %v968 = vpack.c.b16 %v966, %v965
    %v970 = vsel %vm344, %v967, 0
    %v973 = vsel %vm344, %v968, 0
    %975 = vmatprep.subr.bf16.mxu0 %v927
    %976 = vmatpush1.bf16.msra.mxu0 %v926
    %977 = vmatprep.subr.bf16.mxu0 %v929
    %978 = vmatpush1.bf16.msra.mxu0 %v928
    %979 = vmatprep.subr.bf16.mxu0 %v931
    %980 = vmatpush1.bf16.msra.mxu0 %v930
    %981 = vmatprep.subr.bf16.mxu0 %v933
    %982 = vmatpush1.bf16.msra.mxu0 %v932
    %983 = vmatprep.subr.bf16.mxu0 0
    %984 = vmatpush1.bf16.msra.mxu0 0
    %985 = vmatprep.subr.bf16.mxu0 0
    %986 = vmatpush1.bf16.msra.mxu0 0
    %987 = vmatprep.subr.bf16.mxu0 0
    %988 = vmatpush1.bf16.msra.mxu0 0
    %989 = vmatprep.subr.bf16.mxu0 0
    %990 = vmatpush1.bf16.msra.mxu0 0
    %991 = vmatprep.subr.bf16.mxu0 0
    %992 = vmatpush1.bf16.msra.mxu0 0
    %993 = vmatprep.subr.bf16.mxu0 0
    %994 = vmatpush1.bf16.msra.mxu0 0
    %995 = vmatprep.subr.bf16.mxu0 0
    %996 = vmatpush1.bf16.msra.mxu0 0
    %997 = vmatprep.subr.bf16.mxu0 0
    %998 = vmatpush1.bf16.msra.mxu0 0
    %999 = vmatprep.subr.bf16.mxu0 0
    %1000 = vmatpush1.bf16.msra.mxu0 0
    %1001 = vmatprep.subr.bf16.mxu0 0
    %1002 = vmatpush1.bf16.msra.mxu0 0
    %1003 = vmatprep.subr.bf16.mxu0 0
    %1004 = vmatpush1.bf16.msra.mxu0 0
    %1005 = vmatprep.subr.bf16.mxu0 0
    %1006 = vmatpush1.bf16.msra.mxu0 0
    %1007 = vmatprep.mubr.bf16.mxu0 0
    %1008 = vmatmul.mubr.bf16.gmra.mrb[0].mxu0 %v970
    %v1009 = vpop.f32.mrb[0].mxu0
    %v1010 = vadd.f32 %v942, %v1009
    %v1011 = vpop.f32.mrb[0].mxu0
    %v1012 = vadd.f32 %v942, %v1011
    %v1013 = vpop.f32.mrb[0].mxu0
    %v1014 = vadd.f32 %v947, %v1013
    %v1015 = vpop.f32.mrb[0].mxu0
    %v1016 = vadd.f32 %v947, %v1015
    %1017 = vmatprep.mubr.bf16.mxu0 0
    %1018 = vmatmul.mubr.bf16.gmra.mrb[0].mxu0 %v973
    %v1019 = vpop.f32.mrb[0].mxu0
    %v1020 = vadd.f32 %v952, %v1019
    %v1021 = vpop.f32.mrb[0].mxu0
    %v1022 = vadd.f32 %v952, %v1021
    %v1023 = vpop.f32.mrb[0].mxu0
    %v1024 = vadd.f32 %v957, %v1023
    %v1025 = vpop.f32.mrb[0].mxu0
    %v1026 = vadd.f32 %v957, %v1025
    %1027 = vdwg.mxu0
    %v1028 = vsub.f32 %v732, %v1020
    %v1029 = vsub.f32 %v733, %v1022
    %v1030 = vsub.f32 %v734, %v1024
    %v1031 = vsub.f32 %v735, %v1026
    %v1032 = vsub.f32 0.0, %v1010
    %v1033 = vsub.f32 0.0, %v1012
    %v1034 = vsub.f32 0.0, %v1014
    %v1035 = vsub.f32 0.0, %v1016
    %v1036 = vmul.f32 %v1032, 1.442695
    %v1037 = vpow.pop %v1036
    %v1038 = vmul.f32 %v1033, 1.442695
    %v1039 = vpow.pop %v1038
    %v1040 = vmul.f32 %v1034, 1.442695
    %v1041 = vpow.pop %v1040
    %v1042 = vmul.f32 %v1035, 1.442695
    %v1043 = vpow.pop %v1042
    %v1044 = vmul.f32 %v1028, %v1037
    %v1045 = vmul.f32 %v1029, %v1039
    %v1046 = vmul.f32 %v1030, %v1041
    %v1047 = vmul.f32 %v1031, %v1043
    %v1048 = vadd.f32 %v736, %v1010
    %v1049 = vadd.f32 %v737, %v1012
    %v1050 = vadd.f32 %v738, %v1014
    %v1051 = vadd.f32 %v739, %v1016
    %s1052 = scalar_lea.vmem %s1, 96
    %v1053 = vld [vmem:[%s1052] sm:$0xf]
    %v1054 = vld [vmem:[%s1052 + $0x4] sm:$0xf]
    %v1055 = vld [vmem:[%s1052 + $0x8] sm:$0xf]
    %v1056 = vld [vmem:[%s1052 + $0xc] sm:$0xf]
    %v1057 = vld [vmem:[%s1052 + $0x10] sm:$0xf]
    %v1058 = vld [vmem:[%s1052 + $0x14] sm:$0xf]
    %v1059 = vld [vmem:[%s1052 + $0x18] sm:$0xf]
    %v1060 = vld [vmem:[%s1052 + $0x1c] sm:$0xf]
    %v1061 = vpack.c.bf16 %v1046, %v1044
    %v1062 = vpack.c.bf16 %v1047, %v1045
    %s1063 = scalar_lea.vmem %s2, 192
    %v1064 = vld [vmem:[%s1063] sm:$0xff]
    %v1065 = vld [vmem:[%s1063 + $0x8] sm:$0xff]
    %v1066 = vld [vmem:[%s1063 + $0x10] sm:$0xff]
    %v1067 = vld [vmem:[%s1063 + $0x18] sm:$0xff]
    %v1068 = vld [vmem:[%s1063 + $0x20] sm:$0xff]
    %v1069 = vld [vmem:[%s1063 + $0x28] sm:$0xff]
    %v1070 = vld [vmem:[%s1063 + $0x30] sm:$0xff]
    %v1071 = vld [vmem:[%s1063 + $0x38] sm:$0xff]
    %1073 = vset.pattern.permute.xlu0 0
    %1074 = vperm.xlu0 %1073, %v1064
    %v1075 = vpop.permute.xlu0 %1074
    %1078 = vset.pattern.permute.xlu0 0
    %1079 = vperm.xlu0 %1078, %v1065
    %v1080 = vpop.permute.xlu0 %1079
    %1083 = vset.pattern.permute.xlu0 0
    %1084 = vperm.xlu0 %1083, %v1066
    %v1085 = vpop.permute.xlu0 %1084
    %1088 = vset.pattern.permute.xlu0 0
    %1089 = vperm.xlu0 %1088, %v1067
    %v1090 = vpop.permute.xlu0 %1089
    %1093 = vset.pattern.permute.xlu0 0
    %1094 = vperm.xlu0 %1093, %v1068
    %v1095 = vpop.permute.xlu0 %1094
    %1098 = vset.pattern.permute.xlu0 0
    %1099 = vperm.xlu0 %1098, %v1069
    %v1100 = vpop.permute.xlu0 %1099
    %1103 = vset.pattern.permute.xlu0 0
    %1104 = vperm.xlu0 %1103, %v1070
    %v1105 = vpop.permute.xlu0 %1104
    %1108 = vset.pattern.permute.xlu0 0
    %1109 = vperm.xlu0 %1108, %v1071
    %v1110 = vpop.permute.xlu0 %1109
    %v1120 = vunpack.c.l.b16 %v1053
    %v1121 = vunpack.c.l.b16 %v1054
    %v1122 = vunpack.c.l.b16 %v1055
    %v1123 = vunpack.c.l.b16 %v1056
    %v1124 = vunpack.c.l.b16 %v1057
    %v1125 = vunpack.c.l.b16 %v1058
    %v1126 = vunpack.c.l.b16 %v1059
    %v1127 = vunpack.c.l.b16 %v1060
    %v1128 = vpack.c.b16 %v1121, %v1120
    %v1129 = vpack.c.b16 %v1123, %v1122
    %v1130 = vpack.c.b16 %v1125, %v1124
    %v1131 = vpack.c.b16 %v1127, %v1126
    %v1133 = vsel %vm196, %v1128, 0
    %v1136 = vsel %vm196, %v1129, 0
    %v1139 = vsel %vm196, %v1130, 0
    %v1142 = vsel %vm196, %v1131, 0
    %1144 = vmatprep.subr.bf16.mxu0 %v1062
    %1145 = vmatpush1.bf16.msra.mxu0 %v1061
    %1146 = vmatprep.subr.bf16.mxu0 0
    %1147 = vmatpush1.bf16.msra.mxu0 0
    %1148 = vmatprep.subr.bf16.mxu0 0
    %1149 = vmatpush1.bf16.msra.mxu0 0
    %1150 = vmatprep.subr.bf16.mxu0 0
    %1151 = vmatpush1.bf16.msra.mxu0 0
    %1152 = vmatprep.subr.bf16.mxu0 0
    %1153 = vmatpush1.bf16.msra.mxu0 0
    %1154 = vmatprep.subr.bf16.mxu0 0
    %1155 = vmatpush1.bf16.msra.mxu0 0
    %1156 = vmatprep.subr.bf16.mxu0 0
    %1157 = vmatpush1.bf16.msra.mxu0 0
    %1158 = vmatprep.subr.bf16.mxu0 0
    %1159 = vmatpush1.bf16.msra.mxu0 0
    %1160 = vmatprep.subr.bf16.mxu0 0
    %1161 = vmatpush1.bf16.msra.mxu0 0
    %1162 = vmatprep.subr.bf16.mxu0 0
    %1163 = vmatpush1.bf16.msra.mxu0 0
    %1164 = vmatprep.subr.bf16.mxu0 0
    %1165 = vmatpush1.bf16.msra.mxu0 0
    %1166 = vmatprep.subr.bf16.mxu0 0
    %1167 = vmatpush1.bf16.msra.mxu0 0
    %1168 = vmatprep.subr.bf16.mxu0 0
    %1169 = vmatpush1.bf16.msra.mxu0 0
    %1170 = vmatprep.subr.bf16.mxu0 0
    %1171 = vmatpush1.bf16.msra.mxu0 0
    %1172 = vmatprep.subr.bf16.mxu0 0
    %1173 = vmatpush1.bf16.msra.mxu0 0
    %1174 = vmatprep.subr.bf16.mxu0 0
    %1175 = vmatpush1.bf16.msra.mxu0 0
    %1176 = vmatprep.mubr.bf16.mxu0 0
    %1177 = vmatmul.mubr.bf16.gmra.mrb[0].mxu0 %v1133
    %v1178 = vpop.f32.mrb[0].mxu0
    %v1179 = vadd.f32 %v1075, %v1178
    %v1180 = vpop.f32.mrb[0].mxu0
    %v1181 = vadd.f32 %v1075, %v1180
    %v1182 = vpop.f32.mrb[0].mxu0
    %v1183 = vadd.f32 %v1080, %v1182
    %v1184 = vpop.f32.mrb[0].mxu0
    %v1185 = vadd.f32 %v1080, %v1184
    %1186 = vmatprep.mubr.bf16.mxu0 0
    %1187 = vmatmul.mubr.bf16.gmra.mrb[0].mxu0 %v1136
    %v1188 = vpop.f32.mrb[0].mxu0
    %v1189 = vadd.f32 %v1085, %v1188
    %v1190 = vpop.f32.mrb[0].mxu0
    %v1191 = vadd.f32 %v1085, %v1190
    %v1192 = vpop.f32.mrb[0].mxu0
    %v1193 = vadd.f32 %v1090, %v1192
    %v1194 = vpop.f32.mrb[0].mxu0
    %v1195 = vadd.f32 %v1090, %v1194
    %1196 = vmatprep.mubr.bf16.mxu0 0
    %1197 = vmatmul.mubr.bf16.gmra.mrb[0].mxu0 %v1139
    %v1198 = vpop.f32.mrb[0].mxu0
    %v1199 = vadd.f32 %v1095, %v1198
    %v1200 = vpop.f32.mrb[0].mxu0
    %v1201 = vadd.f32 %v1095, %v1200
    %v1202 = vpop.f32.mrb[0].mxu0
    %v1203 = vadd.f32 %v1100, %v1202
    %v1204 = vpop.f32.mrb[0].mxu0
    %v1205 = vadd.f32 %v1100, %v1204
    %1206 = vmatprep.mubr.bf16.mxu0 0
    %1207 = vmatmul.mubr.bf16.gmra.mrb[0].mxu0 %v1142
    %v1208 = vpop.f32.mrb[0].mxu0
    %v1209 = vadd.f32 %v1105, %v1208
    %v1210 = vpop.f32.mrb[0].mxu0
    %v1211 = vadd.f32 %v1105, %v1210
    %v1212 = vpop.f32.mrb[0].mxu0
    %v1213 = vadd.f32 %v1110, %v1212
    %v1214 = vpop.f32.mrb[0].mxu0
    %v1215 = vadd.f32 %v1110, %v1214
    %1216 = vdwg.mxu0
    %v1217 = vmax.f32 %v1179, 0.0
    %v1218 = vmax.f32 %v1181, 0.0
    %v1219 = vmax.f32 %v1183, 0.0
    %v1220 = vmax.f32 %v1185, 0.0
    %v1221 = vmax.f32 %v1189, 0.0
    %v1222 = vmax.f32 %v1191, 0.0
    %v1223 = vmax.f32 %v1193, 0.0
    %v1224 = vmax.f32 %v1195, 0.0
    %v1225 = vmax.f32 %v1199, 0.0
    %v1226 = vmax.f32 %v1201, 0.0
    %v1227 = vmax.f32 %v1203, 0.0
    %v1228 = vmax.f32 %v1205, 0.0
    %v1229 = vmax.f32 %v1209, 0.0
    %v1230 = vmax.f32 %v1211, 0.0
    %v1231 = vmax.f32 %v1213, 0.0
    %v1232 = vmax.f32 %v1215, 0.0
    %s1233 = scalar_lea.vmem %s3, 48
    %v1234 = vld [vmem:[%s1233] sm:$0xf]
    %v1235 = vld [vmem:[%s1233 + $0x4] sm:$0xf]
    %v1236 = vld [vmem:[%s1233 + $0x8] sm:$0xf]
    %v1237 = vld [vmem:[%s1233 + $0xc] sm:$0xf]
    %v1238 = vpack.c.bf16 %v1219, %v1217
    %v1239 = vpack.c.bf16 %v1220, %v1218
    %v1240 = vpack.c.bf16 %v1223, %v1221
    %v1241 = vpack.c.bf16 %v1224, %v1222
    %v1242 = vpack.c.bf16 %v1227, %v1225
    %v1243 = vpack.c.bf16 %v1228, %v1226
    %v1244 = vpack.c.bf16 %v1231, %v1229
    %v1245 = vpack.c.bf16 %v1232, %v1230
    %s1246 = scalar_lea.vmem %s4, 96
    %v1247 = vld [vmem:[%s1246] sm:$0xff]
    %v1248 = vld [vmem:[%s1246 + $0x8] sm:$0xff]
    %v1249 = vld [vmem:[%s1246 + $0x10] sm:$0xff]
    %v1250 = vld [vmem:[%s1246 + $0x18] sm:$0xff]
    %1252 = vset.pattern.permute.xlu0 0
    %1253 = vperm.xlu0 %1252, %v1247
    %v1254 = vpop.permute.xlu0 %1253
    %1257 = vset.pattern.permute.xlu0 0
    %1258 = vperm.xlu0 %1257, %v1248
    %v1259 = vpop.permute.xlu0 %1258
    %1262 = vset.pattern.permute.xlu0 0
    %1263 = vperm.xlu0 %1262, %v1249
    %v1264 = vpop.permute.xlu0 %1263
    %1267 = vset.pattern.permute.xlu0 0
    %1268 = vperm.xlu0 %1267, %v1250
    %v1269 = vpop.permute.xlu0 %1268
    %v1275 = vunpack.c.l.b16 %v1234
    %v1276 = vunpack.c.l.b16 %v1235
    %v1277 = vunpack.c.l.b16 %v1236
    %v1278 = vunpack.c.l.b16 %v1237
    %v1279 = vpack.c.b16 %v1276, %v1275
    %v1280 = vpack.c.b16 %v1278, %v1277
    %v1282 = vsel %vm344, %v1279, 0
    %v1285 = vsel %vm344, %v1280, 0
    %1287 = vmatprep.subr.bf16.mxu0 %v1239
    %1288 = vmatpush1.bf16.msra.mxu0 %v1238
    %1289 = vmatprep.subr.bf16.mxu0 %v1241
    %1290 = vmatpush1.bf16.msra.mxu0 %v1240
    %1291 = vmatprep.subr.bf16.mxu0 %v1243
    %1292 = vmatpush1.bf16.msra.mxu0 %v1242
    %1293 = vmatprep.subr.bf16.mxu0 %v1245
    %1294 = vmatpush1.bf16.msra.mxu0 %v1244
    %1295 = vmatprep.subr.bf16.mxu0 0
    %1296 = vmatpush1.bf16.msra.mxu0 0
    %1297 = vmatprep.subr.bf16.mxu0 0
    %1298 = vmatpush1.bf16.msra.mxu0 0
    %1299 = vmatprep.subr.bf16.mxu0 0
    %1300 = vmatpush1.bf16.msra.mxu0 0
    %1301 = vmatprep.subr.bf16.mxu0 0
    %1302 = vmatpush1.bf16.msra.mxu0 0
    %1303 = vmatprep.subr.bf16.mxu0 0
    %1304 = vmatpush1.bf16.msra.mxu0 0
    %1305 = vmatprep.subr.bf16.mxu0 0
    %1306 = vmatpush1.bf16.msra.mxu0 0
    %1307 = vmatprep.subr.bf16.mxu0 0
    %1308 = vmatpush1.bf16.msra.mxu0 0
    %1309 = vmatprep.subr.bf16.mxu0 0
    %1310 = vmatpush1.bf16.msra.mxu0 0
    %1311 = vmatprep.subr.bf16.mxu0 0
    %1312 = vmatpush1.bf16.msra.mxu0 0
    %1313 = vmatprep.subr.bf16.mxu0 0
    %1314 = vmatpush1.bf16.msra.mxu0 0
    %1315 = vmatprep.subr.bf16.mxu0 0
    %1316 = vmatpush1.bf16.msra.mxu0 0
    %1317 = vmatprep.subr.bf16.mxu0 0
    %1318 = vmatpush1.bf16.msra.mxu0 0
    %1319 = vmatprep.mubr.bf16.mxu0 0
    %1320 = vmatmul.mubr.bf16.gmra.mrb[0].mxu0 %v1282
    %v1321 = vpop.f32.mrb[0].mxu0
    %v1322 = vadd.f32 %v1254, %v1321
    %v1323 = vpop.f32.mrb[0].mxu0
    %v1324 = vadd.f32 %v1254, %v1323
    %v1325 = vpop.f32.mrb[0].mxu0
    %v1326 = vadd.f32 %v1259, %v1325
    %v1327 = vpop.f32.mrb[0].mxu0
    %v1328 = vadd.f32 %v1259, %v1327
    %1329 = vmatprep.mubr.bf16.mxu0 0
    %1330 = vmatmul.mubr.bf16.gmra.mrb[0].mxu0 %v1285
    %v1331 = vpop.f32.mrb[0].mxu0
    %v1332 = vadd.f32 %v1264, %v1331
    %v1333 = vpop.f32.mrb[0].mxu0
    %v1334 = vadd.f32 %v1264, %v1333
    %v1335 = vpop.f32.mrb[0].mxu0
    %v1336 = vadd.f32 %v1269, %v1335
    %v1337 = vpop.f32.mrb[0].mxu0
    %v1338 = vadd.f32 %v1269, %v1337
    %1339 = vdwg.mxu0
    %v1340 = vsub.f32 %v1044, %v1332
    %v1341 = vsub.f32 %v1045, %v1334
    %v1342 = vsub.f32 %v1046, %v1336
    %v1343 = vsub.f32 %v1047, %v1338
    %v1344 = vsub.f32 0.0, %v1322
    %v1345 = vsub.f32 0.0, %v1324
    %v1346 = vsub.f32 0.0, %v1326
    %v1347 = vsub.f32 0.0, %v1328
    %v1348 = vmul.f32 %v1344, 1.442695
    %v1349 = vpow.pop %v1348
    %v1350 = vmul.f32 %v1345, 1.442695
    %v1351 = vpow.pop %v1350
    %v1352 = vmul.f32 %v1346, 1.442695
    %v1353 = vpow.pop %v1352
    %v1354 = vmul.f32 %v1347, 1.442695
    %v1355 = vpow.pop %v1354
    %v1356 = vmul.f32 %v1340, %v1349
    %v1357 = vmul.f32 %v1341, %v1351
    %v1358 = vmul.f32 %v1342, %v1353
    %v1359 = vmul.f32 %v1343, %v1355
    %v1360 = vadd.f32 %v1048, %v1322
    %v1361 = vadd.f32 %v1049, %v1324
    %v1362 = vadd.f32 %v1050, %v1326
    %v1363 = vadd.f32 %v1051, %v1328
    %v1364 = vmul.f32 %v1356, 0.5
    %v1365 = vmul.f32 %v1357, 0.5
    %v1366 = vmul.f32 %v1358, 0.5
    %v1367 = vmul.f32 %v1359, 0.5
    %v1368 = vmul.f32 %v1364, %v1356
    %v1369 = vmul.f32 %v1365, %v1357
    %v1370 = vmul.f32 %v1366, %v1358
    %v1371 = vmul.f32 %v1367, %v1359
    %v1372 = vadd.f32 %v1368, %v1360
    %v1373 = vadd.f32 %v1369, %v1361
    %v1374 = vadd.f32 %v1370, %v1362
    %v1375 = vadd.f32 %v1371, %v1363
    %v1376 = vadd.f32 %v1372, %v1374
    %v1377 = vrot.slane %v1376, 4
    %v1378 = vadd.f32 %v1376, %v1377
    %v1379 = vrot.slane %v1378, 2
    %v1380 = vadd.f32 %v1378, %v1379
    %v1381 = vrot.slane %v1380, 1
    %v1382 = vadd.f32 %v1380, %v1381
    %v1383 = vadd.f32 %v1373, %v1375
    %v1384 = vrot.slane %v1383, 4
    %v1385 = vadd.f32 %v1383, %v1384
    %v1386 = vrot.slane %v1385, 2
    %v1387 = vadd.f32 %v1385, %v1386
    %v1388 = vrot.slane %v1387, 1
    %v1389 = vadd.f32 %v1387, %v1388
    %v1390 = vsub.f32 0.0, %v1382
    %v1391 = vsub.f32 0.0, %v1389
    %v1394 = vcombine.low %v1390, %v1391
    %v1396 = vunpack.c.l.s4 1966171168
    %v1397 = vunpack.c.0.s8 %v1396
    %v1398 = vlaneseq
    %v1399 = vshrl.u32 %v1398, 7
    %v1400 = vsub.s32 %v1397, %v1399
    %v1401 = vrot.slane %v1394, %v1400
    %v1403 = vunpack.c.l.s4 1966171168
    %v1404 = vunpack.c.0.s8 %v1403
    %v1405 = vlaneseq
    %v1406 = vshrl.u32 %v1405, 7
    %v1407 = vsub.s32 %v1404, %v1406
    %v1408 = vrot.slane %v1401, %v1407
    %v1410 = vlaneseq
    %vm1411 = vcmp.ge.s32.totalorder %v1410, 0
    %vm1412 = vcmp.lt.s32.totalorder %v1410, 256
    %vm1413 = vmand %vm1411, %vm1412
    %1414 = vst.msk [vmem:[#allocation2] sm:$0x3] %vm1413, %v1408
    // Predicated region
    $region22: #{tpu_custom_call.1} parent=1 // pred_check
      _
    $region23: #{tpu_custom_call.1} parent=1 // pred_check_branch
      %1416 = sbr.rel (0) target = $region25
    $region24: #{tpu_custom_call.1} parent=1 // pred_region
      %s1418 = ssub.s32 32, 32
      %1419 = vsyncadd [#allocation3], %s1418
      %s1421 = sshll.u32 [#allocation2], 4
      %s1422 = int_to_ptr.vmem [resolvable:$true] %s1421
      %1424 = dma.vmem_to_hbm [thread:$0]  %s1422, 32, %s5, [#allocation3]
    $region25: #{tpu_custom_call.1} parent=1 // pred_fallthru
      _
    // Predicated region
    $region26: #{tpu_custom_call.1} parent=1 // pred_check
      _
    $region27: #{tpu_custom_call.1} parent=1 // pred_check_branch
      %1426 = sbr.rel (0) target = $region29
    $region28: #{tpu_custom_call.1} parent=1 // pred_region
      %1427 = dma.done [#allocation3], 32
    $region29: #{tpu_custom_call.1} parent=1 // pred_fallthru
      _
    %1428 = vsyncpa [#allocation3], 1

</llo_original>
